<compile_context>
chip_gen: v5e
topology: v5e:2x2
jax: 0.10.0
libtpu: 0.0.40
codegen_flags: <defaults>
</compile_context>

<pallas_src>
import functools

import jax
import jax.numpy as jnp
from jax.experimental import pallas as pl
from jax.experimental.pallas import tpu as pltpu

_LANES = 128


# ----------------------------- Pallas kernel -------------------------------

def _deepfm_kernel(xT_ref, wfT_ref, w1T_ref, b1_ref, w2T_ref, b2_ref, wo_ref,
                   out_ref, *, fe):
    xT = xT_ref[...]                                            # [128, tb] bf16

    # One fused MXU pass:
    #   rows 0..fe-1   -> dense_linear pre-activation (bias folded via 1-lane)
    #   rows fe..2fe-1 -> FM quadratic projection (sum_f emb - emb)_{f,e}
    #   row  2fe       -> FM 1st-order logit incl. b1st + bo
    preT = jnp.dot(wfT_ref[...], xT, preferred_element_type=jnp.float32)

    emb2fT = xT[0:fe, :].astype(jnp.float32)                    # [fe, tb]
    denseT = jnp.maximum(preT[0:fe, :], 0.0)                    # relu(xd@wd+bd)
    qprojT = preT[fe:2 * fe, :]                                 # [fe, tb]
    fm_1st = preT[2 * fe:2 * fe + 1, :]                         # [1, tb]

    # FM 2nd order (sum-square trick via the quadratic form Q = S S^T - I):
    #   0.5 * sum_{f,e} emb * (sum_f emb - emb)   -- a sublane reduction.
    fm_2nd = 0.5 * jnp.sum(qprojT * emb2fT, axis=0, keepdims=True)

    # DNN tower (BatchNorm folded into w1/b1, w2/b2; dropout = eval identity).
    hT = (emb2fT + denseT).astype(jnp.bfloat16)                 # [fe, tb]
    hT = jnp.dot(w1T_ref[...], hT,
                 preferred_element_type=jnp.float32) + b1_ref[...]
    hT = jnp.maximum(hT, 0.0).astype(jnp.bfloat16)
    hT = jnp.dot(w2T_ref[...], hT,
                 preferred_element_type=jnp.float32) + b2_ref[...]
    hT = jnp.maximum(hT, 0.0)
    dnn = jnp.sum(hT * wo_ref[...], axis=0, keepdims=True)      # [1, tb]

    out_ref[...] = jax.nn.sigmoid(fm_1st + fm_2nd + dnn)        # lane-dense


# ----------------------------- parameter folding ---------------------------

def fold_params(params, *, num_fields, emb_size, num_dense):
    """One-time parameter transform (plain JAX, outside the kernel):
      * fold eval-mode BatchNorm affine into the hidden linear layers,
      * build the block-structured front matrix (wd + bd, FM quadratic form
        Q = S S^T - I, FM-1st column with folded b1st + bo),
      * transpose everything to the kernel's feature-major layout and cast the
        matmul operands to bf16 (f32 accumulation happens on the MXU)."""
    f32, bf16 = jnp.float32, jnp.bfloat16
    F, E, D = num_fields, emb_size, num_dense
    FE = F * E
    C = _LANES
    assert 2 * FE + 1 <= C and FE + D + 2 <= C

    # Row layout of the packed feature-major input.
    r_emb2, r_xd, r_e1, r_one = 0, FE, FE + D, FE + D + 1

    # BatchNorm (eval) folded into the linear layers.
    w1 = params["w1"] * params["s1"]
    b1 = params["b1"] * params["s1"] + params["sh1"]
    w2 = params["w2"] * params["s2"]
    b2 = params["b2"] * params["s2"] + params["sh2"]

    # FM 2nd-order quadratic form; entries are exactly {0, 1} -> exact in bf16.
    s_mat = jnp.tile(jnp.eye(E, dtype=f32), (F, 1))             # [FE, E]
    q_mat = s_mat @ s_mat.T - jnp.eye(FE, dtype=f32)            # [FE, FE]

    # Block-structured front matrix [C, C]:
    #   cols 0..FE-1   : dense_linear (wd at xd rows, bd at the ones row)
    #   cols FE..2FE-1 : Q at the emb2f rows
    #   col  2FE       : w1st at xd rows, 1 at emb1_sum row, b1st+bo at ones row
    wf = jnp.zeros((C, C), f32)
    wf = wf.at[r_xd:r_xd + D, 0:FE].set(params["wd"])
    wf = wf.at[r_one, 0:FE].set(params["bd"][0])
    wf = wf.at[r_emb2:r_emb2 + FE, FE:2 * FE].set(q_mat)
    wf = wf.at[r_xd:r_xd + D, 2 * FE].set(params["w1st"][:, 0])
    wf = wf.at[r_e1, 2 * FE].set(1.0)
    wf = wf.at[r_one, 2 * FE].set(params["b1st"][0, 0] + params["bo"][0, 0])

    return {
        "wfT": wf.T.astype(bf16),                        # [C, C]
        "w1T": w1.T.astype(bf16),                        # [H1, FE]
        "b1c": b1.reshape(-1, 1).astype(f32),            # [H1, 1]
        "w2T": w2.T.astype(bf16),                        # [H2, H1]
        "b2c": b2.reshape(-1, 1).astype(f32),            # [H2, 1]
        "woc": params["wo"].reshape(-1, 1).astype(f32),  # [H2, 1]
    }


# ----------------------------- tiling helpers -------------------------------

def _round_up(x, m):
    return ((x + m - 1) // m) * m


def _num_tensorcores_per_chip():
    # v7x has 2 TensorCores per chip; v5e / v6e have 1.
    try:
        kind = jax.devices()[0].device_kind.lower()
    except Exception:
        return 1
    return 2 if "v7" in kind else 1


def _pick_batch_tiling(batch, num_tc, tile_cap=512):
    bp = _round_up(batch, _LANES)
    if num_tc <= 1:
        tb = min(tile_cap, bp)                     # grid = 1 on v5e / v6e
    else:
        tb = min(tile_cap, max(_LANES, bp // num_tc))
    tb = max(_LANES, (tb // _LANES) * _LANES)      # lane-aligned batch tile
    bp = _round_up(batch, tb)
    if num_tc > 1 and (bp // tb) % num_tc != 0:
        bp = _round_up(batch, tb * num_tc)         # grid divisible by #TCs
    return bp, tb


# ----------------------------- wrapper ---------------------------------------

def deepfm_forward(folded, emb1_sum, emb2f, xd):
    """emb1_sum:[B,1] (pre-summed 1st-order sparse embeddings),
    emb2f:[B,F*E] (flattened 2nd-order embeddings), xd:[B,D]  ->  [B,1]."""
    B, FE = emb2f.shape
    D = xd.shape[1]
    C = _LANES
    H1 = folded["w1T"].shape[0]
    H2 = folded["w2T"].shape[0]

    num_tc = _num_tensorcores_per_chip()
    Bp, tb = _pick_batch_tiling(B, num_tc)

    # Single lane-dense feature-major input: [emb2f | xd | emb1_sum | 1 | 0...].
    feat = jnp.concatenate(
        [emb2f.astype(jnp.bfloat16),
         xd.astype(jnp.bfloat16),
         emb1_sum.reshape(B, 1).astype(jnp.bfloat16),
         jnp.ones((B, 1), jnp.bfloat16),
         jnp.zeros((B, C - (FE + D + 2)), jnp.bfloat16)],
        axis=1)                                          # [B, C]
    xT = feat.T                                          # [C, B] feature-major
    if Bp != B:
        xT = jnp.pad(xT, ((0, 0), (0, Bp - B)))

    grid = (Bp // tb,)

    def resident(shape):
        return pl.BlockSpec(shape, lambda i: (0,) * len(shape))

    kernel = functools.partial(_deepfm_kernel, fe=FE)
    out = pl.pallas_call(
        kernel,
        out_shape=jax.ShapeDtypeStruct((1, Bp), jnp.float32),
        grid=grid,
        in_specs=[
            pl.BlockSpec((C, tb), lambda i: (0, i)),     # packed activations
            resident((C, C)),                            # fused front matrix
            resident((H1, FE)),                          # w1 (BN folded, T)
            resident((H1, 1)),                           # b1
            resident((H2, H1)),                          # w2 (BN folded, T)
            resident((H2, 1)),                           # b2
            resident((H2, 1)),                           # dnn output head
        ],
        out_specs=pl.BlockSpec((1, tb), lambda i: (0, i)),   # lane-dense out
        compiler_params=pltpu.CompilerParams(
            dimension_semantics=("parallel",)),
    )(xT, folded["wfT"], folded["w1T"], folded["b1c"],
      folded["w2T"], folded["b2c"], folded["woc"])
    return out.reshape(Bp, 1)[:B]


# ----------------------------- reference (plain JAX, f32) --------------------

def deepfm_reference(emb1, emb2, xd, p):
    B = emb1.shape[0]
    fm1 = jnp.sum(emb1, axis=1, keepdims=True) + xd @ p["w1st"] + p["b1st"]
    sum_embed = jnp.sum(emb2, axis=1)
    fm2 = 0.5 * jnp.sum(sum_embed * sum_embed - jnp.sum(emb2 * emb2, axis=1),
                        axis=1, keepdims=True)
    h = emb2.reshape(B, -1) + jax.nn.relu(xd @ p["wd"] + p["bd"])
    h = jax.nn.relu((h @ p["w1"] + p["b1"]) * p["s1"] + p["sh1"])
    h = jax.nn.relu((h @ p["w2"] + p["b2"]) * p["s2"] + p["sh2"])
    dnn_out = h @ p["wo"] + p["bo"]
    return jax.nn.sigmoid(fm1 + fm2 + dnn_out)


# ----------------------------- main ------------------------------------------

if __name__ == "__main__":
    # Module-default sizes (emb_size=8, hidden_dims=[256,128]); small batch.
    cate_fea_uniques = [10, 20, 30, 40, 50, 60]   # 6 sparse fields
    F = len(cate_fea_uniques)
    D = 13                                        # num_fea_size (dense feats)
    E = 8                                         # emb_size
    H1, H2 = 256, 128                             # hidden_dims
    B = 512

    key = jax.random.PRNGKey(0)
    ks = jax.random.split(key, 40)
    ki = iter(range(40))

    def nrm(shape, scale=0.05):
        return (scale * jax.random.normal(ks[next(ki)], shape)).astype(jnp.float32)

    # Embedding tables (deterministic synthetic init).
    tables_1st = [nrm((v, 1)) for v in cate_fea_uniques]
    tables_2nd = [nrm((v, E)) for v in cate_fea_uniques]

    # Linear / BN parameters.  BatchNorm1d (eval) as per-feature affine.
    eps = 1e-5
    params = {
        "w1st": nrm((D, 1)),        "b1st": nrm((1, 1)),
        "wd":   nrm((D, F * E)),    "bd":   nrm((1, F * E)),
        "w1":   nrm((F * E, H1)),   "b1":   nrm((1, H1)),
        "w2":   nrm((H1, H2)),      "b2":   nrm((1, H2)),
        "wo":   nrm((H2, 1)),       "bo":   nrm((1, 1)),
    }
    gamma1, beta1 = 1.0 + nrm((1, H1)), nrm((1, H1))
    gamma2, beta2 = 1.0 + nrm((1, H2)), nrm((1, H2))
    rm1, rv1 = jnp.zeros((1, H1), jnp.float32), jnp.ones((1, H1), jnp.float32)
    rm2, rv2 = jnp.zeros((1, H2), jnp.float32), jnp.ones((1, H2), jnp.float32)
    params["s1"] = gamma1 / jnp.sqrt(rv1 + eps)
    params["sh1"] = beta1 - rm1 * params["s1"]
    params["s2"] = gamma2 / jnp.sqrt(rv2 + eps)
    params["sh2"] = beta2 - rm2 * params["s2"]

    # Inputs (deterministic, derived from PRNGKey(0) splits).
    kx = jax.random.split(ks[next(ki)], F + 1)
    X_sparse = jnp.stack(
        [jax.random.randint(kx[i], (B,), 0, cate_fea_uniques[i]) for i in range(F)],
        axis=1)                                                    # [B, F] int32
    X_dense = jax.random.normal(kx[F], (B, D), dtype=jnp.float32)  # [B, D]

    # Glue: embedding gathers (ragged per-field vocab tables stay in XLA).
    # Slimmed per review: emb1 pre-summed to [B,1] (f32), 2nd-order tables
    # cast to bf16 once so the gather emits bf16 directly.
    # TODO(synk): pack the per-field tables into one offset-indexed bf16 table
    # and fuse the gather into the kernel via scalar prefetch.
    emb1 = jnp.concatenate(
        [tables_1st[i][X_sparse[:, i]] for i in range(F)], axis=1)       # [B, F]
    emb1_sum = jnp.sum(emb1, axis=1, keepdims=True)                      # [B, 1]
    tables_2nd_bf16 = [t.astype(jnp.bfloat16) for t in tables_2nd]
    emb2f = jnp.concatenate(
        [tables_2nd_bf16[i][X_sparse[:, i]] for i in range(F)], axis=1)  # [B, F*E]

    folded = fold_params(params, num_fields=F, emb_size=E, num_dense=D)

    fwd = jax.jit(deepfm_forward)
    out = jax.block_until_ready(fwd(folded, emb1_sum, emb2f, X_dense))

    # Reference in plain f32 JAX.
    emb2 = jnp.stack(
        [tables_2nd[i][X_sparse[:, i]] for i in range(F)], axis=1)       # [B, F, E]
    ref = deepfm_reference(emb1, emb2, X_dense, params)

    assert out.shape == (B, 1)
    max_err = float(jnp.max(jnp.abs(out - ref)))
    # bf16 inputs/weights vs. f32 reference -> loosened tolerance.
    assert jnp.allclose(out, ref, atol=2e-2, rtol=0.0), max_err

    print("KERNEL_OK")
</pallas_src>

<mosaic_0001>
module attributes {stable_mosaic.version = 11 : i64} {
  func.func @_deepfm_kernel(%arg0: i32, %arg1: memref<128x512xbf16, #tpu.memory_space<vmem>>, %arg2: memref<128x128xbf16, #tpu.memory_space<vmem>>, %arg3: memref<256x48xbf16, #tpu.memory_space<vmem>>, %arg4: memref<256x1xf32, #tpu.memory_space<vmem>>, %arg5: memref<128x256xbf16, #tpu.memory_space<vmem>>, %arg6: memref<128x1xf32, #tpu.memory_space<vmem>>, %arg7: memref<128x1xf32, #tpu.memory_space<vmem>>, %arg8: memref<1x512xf32, #tpu.memory_space<vmem>>) attributes {dimension_semantics = [#tpu.dimension_semantics<parallel>], iteration_bounds = array<i64: 1>, scalar_prefetch = 0 : i64, scratch_operands = 0 : i64, tpu.core_type = #tpu.core_type<tc>, window_params = [{transform_indices = @transform_0, window_bounds = array<i64: 128, 512>}, {pipeline_mode = #tpu.pipeline_mode<synchronous>, transform_indices = @transform_1, window_bounds = array<i64: 128, 128>}, {pipeline_mode = #tpu.pipeline_mode<synchronous>, transform_indices = @transform_2, window_bounds = array<i64: 256, 48>}, {pipeline_mode = #tpu.pipeline_mode<synchronous>, transform_indices = @transform_3, window_bounds = array<i64: 256, 1>}, {pipeline_mode = #tpu.pipeline_mode<synchronous>, transform_indices = @transform_4, window_bounds = array<i64: 128, 256>}, {pipeline_mode = #tpu.pipeline_mode<synchronous>, transform_indices = @transform_5, window_bounds = array<i64: 128, 1>}, {pipeline_mode = #tpu.pipeline_mode<synchronous>, transform_indices = @transform_6, window_bounds = array<i64: 128, 1>}, {transform_indices = @transform_7, window_bounds = array<i64: 1, 512>}]} {
    %c0 = arith.constant 0 : index
    %c0_0 = arith.constant 0 : index
    %0 = vector.load %arg1[%c0, %c0_0] : memref<128x512xbf16, #tpu.memory_space<vmem>>, vector<128x512xbf16>
    %c0_1 = arith.constant 0 : index
    %c0_2 = arith.constant 0 : index
    %1 = vector.load %arg2[%c0_1, %c0_2] : memref<128x128xbf16, #tpu.memory_space<vmem>>, vector<128x128xbf16>
    %cst = arith.constant dense<0.000000e+00> : vector<128x512xf32>
    %2 = tpu.matmul %1, %0, %cst {dimension_numbers = #tpu.dot_dimension_numbers<[1], [0], [0], [1], [0, 0, 1, 1], [], []>} : vector<128x128xbf16>, vector<128x512xbf16>, vector<128x512xf32> -> vector<128x512xf32>
    %3 = vector.extract_strided_slice %0 {offsets = [0, 0], sizes = [48, 512], strides = [1, 1]} : vector<128x512xbf16> to vector<48x512xbf16>
    %4 = arith.extf %3 : vector<48x512xbf16> to vector<48x512xf32>
    %5 = vector.extract_strided_slice %2 {offsets = [0, 0], sizes = [48, 512], strides = [1, 1]} : vector<128x512xf32> to vector<48x512xf32>
    %cst_3 = arith.constant 0.000000e+00 : f32
    %6 = vector.broadcast %cst_3 : f32 to vector<48x512xf32>
    %7 = arith.maximumf %5, %6 : vector<48x512xf32>
    %8 = vector.extract_strided_slice %2 {offsets = [48, 0], sizes = [48, 512], strides = [1, 1]} : vector<128x512xf32> to vector<48x512xf32>
    %9 = vector.extract_strided_slice %2 {offsets = [96, 0], sizes = [1, 512], strides = [1, 1]} : vector<128x512xf32> to vector<1x512xf32>
    %10 = arith.mulf %8, %4 : vector<48x512xf32>
    %cst_4 = arith.constant dense<0.000000e+00> : vector<512xf32>
    %11 = vector.multi_reduction <add>, %10, %cst_4 [0] : vector<48x512xf32> to vector<512xf32>
    %12 = vector.shape_cast %11 : vector<512xf32> to vector<1x512xf32>
    %cst_5 = arith.constant 5.000000e-01 : f32
    %13 = vector.broadcast %cst_5 : f32 to vector<1x512xf32>
    %14 = arith.mulf %13, %12 : vector<1x512xf32>
    %15 = arith.addf %4, %7 : vector<48x512xf32>
    %16 = arith.truncf %15 : vector<48x512xf32> to vector<48x512xbf16>
    %c0_6 = arith.constant 0 : index
    %c0_7 = arith.constant 0 : index
    %17 = vector.load %arg3[%c0_6, %c0_7] : memref<256x48xbf16, #tpu.memory_space<vmem>>, vector<256x48xbf16>
    %cst_8 = arith.constant dense<0.000000e+00> : vector<256x512xf32>
    %18 = tpu.matmul %17, %16, %cst_8 {dimension_numbers = #tpu.dot_dimension_numbers<[1], [0], [0], [1], [0, 0, 1, 1], [], []>} : vector<256x48xbf16>, vector<48x512xbf16>, vector<256x512xf32> -> vector<256x512xf32>
    %c0_9 = arith.constant 0 : index
    %c0_10 = arith.constant 0 : index
    %19 = vector.load %arg4[%c0_9, %c0_10] : memref<256x1xf32, #tpu.memory_space<vmem>>, vector<256x1xf32>
    %20 = vector.broadcast %19 : vector<256x1xf32> to vector<256x512xf32>
    %21 = arith.addf %18, %20 : vector<256x512xf32>
    %cst_11 = arith.constant 0.000000e+00 : f32
    %22 = vector.broadcast %cst_11 : f32 to vector<256x512xf32>
    %23 = arith.maximumf %21, %22 : vector<256x512xf32>
    %24 = arith.truncf %23 : vector<256x512xf32> to vector<256x512xbf16>
    %c0_12 = arith.constant 0 : index
    %c0_13 = arith.constant 0 : index
    %25 = vector.load %arg5[%c0_12, %c0_13] : memref<128x256xbf16, #tpu.memory_space<vmem>>, vector<128x256xbf16>
    %cst_14 = arith.constant dense<0.000000e+00> : vector<128x512xf32>
    %26 = tpu.matmul %25, %24, %cst_14 {dimension_numbers = #tpu.dot_dimension_numbers<[1], [0], [0], [1], [0, 0, 1, 1], [], []>} : vector<128x256xbf16>, vector<256x512xbf16>, vector<128x512xf32> -> vector<128x512xf32>
    %c0_15 = arith.constant 0 : index
    %c0_16 = arith.constant 0 : index
    %27 = vector.load %arg6[%c0_15, %c0_16] : memref<128x1xf32, #tpu.memory_space<vmem>>, vector<128x1xf32>
    %28 = vector.broadcast %27 : vector<128x1xf32> to vector<128x512xf32>
    %29 = arith.addf %26, %28 : vector<128x512xf32>
    %cst_17 = arith.constant 0.000000e+00 : f32
    %30 = vector.broadcast %cst_17 : f32 to vector<128x512xf32>
    %31 = arith.maximumf %29, %30 : vector<128x512xf32>
    %c0_18 = arith.constant 0 : index
    %c0_19 = arith.constant 0 : index
    %32 = vector.load %arg7[%c0_18, %c0_19] : memref<128x1xf32, #tpu.memory_space<vmem>>, vector<128x1xf32>
    %33 = vector.broadcast %32 : vector<128x1xf32> to vector<128x512xf32>
    %34 = arith.mulf %31, %33 : vector<128x512xf32>
    %cst_20 = arith.constant dense<0.000000e+00> : vector<512xf32>
    %35 = vector.multi_reduction <add>, %34, %cst_20 [0] : vector<128x512xf32> to vector<512xf32>
    %36 = vector.shape_cast %35 : vector<512xf32> to vector<1x512xf32>
    %37 = arith.addf %9, %14 : vector<1x512xf32>
    %38 = arith.addf %37, %36 : vector<1x512xf32>
    %39 = arith.negf %38 : vector<1x512xf32>
    %40 = math.exp %39 : vector<1x512xf32>
    %cst_21 = arith.constant 1.000000e+00 : f32
    %41 = vector.broadcast %cst_21 : f32 to vector<1x512xf32>
    %42 = arith.addf %41, %40 : vector<1x512xf32>
    %43 = arith.divf %41, %42 : vector<1x512xf32>
    %c0_22 = arith.constant 0 : index
    %c0_23 = arith.constant 0 : index
    %44 = vector.load %arg8[%c0_22, %c0_23] : memref<1x512xf32, #tpu.memory_space<vmem>>, vector<1x512xf32>
    tpu.vector_store %arg8[%c0_22, %c0_23], %43 {strides = array<i32>} : memref<1x512xf32, #tpu.memory_space<vmem>>, vector<1x512xf32>,
    return
  }
  func.func @transform_0(%arg0: i32) -> (i32, i32) {
    %c0_i32 = arith.constant 0 : i32
    %c0_i32_0 = arith.constant 0 : i32
    return %c0_i32, %arg0 : i32, i32
  }
  func.func @transform_1(%arg0: i32) -> (i32, i32) {
    %c0_i32 = arith.constant 0 : i32
    %c0_i32_0 = arith.constant 0 : i32
    %c0_i32_1 = arith.constant 0 : i32
    return %c0_i32, %c0_i32_0 : i32, i32
  }
  func.func @transform_2(%arg0: i32) -> (i32, i32) {
    %c0_i32 = arith.constant 0 : i32
    %c0_i32_0 = arith.constant 0 : i32
    %c0_i32_1 = arith.constant 0 : i32
    return %c0_i32, %c0_i32_0 : i32, i32
  }
  func.func @transform_3(%arg0: i32) -> (i32, i32) {
    %c0_i32 = arith.constant 0 : i32
    %c0_i32_0 = arith.constant 0 : i32
    %c0_i32_1 = arith.constant 0 : i32
    return %c0_i32, %c0_i32_0 : i32, i32
  }
  func.func @transform_4(%arg0: i32) -> (i32, i32) {
    %c0_i32 = arith.constant 0 : i32
    %c0_i32_0 = arith.constant 0 : i32
    %c0_i32_1 = arith.constant 0 : i32
    return %c0_i32, %c0_i32_0 : i32, i32
  }
  func.func @transform_5(%arg0: i32) -> (i32, i32) {
    %c0_i32 = arith.constant 0 : i32
    %c0_i32_0 = arith.constant 0 : i32
    %c0_i32_1 = arith.constant 0 : i32
    return %c0_i32, %c0_i32_0 : i32, i32
  }
  func.func @transform_6(%arg0: i32) -> (i32, i32) {
    %c0_i32 = arith.constant 0 : i32
    %c0_i32_0 = arith.constant 0 : i32
    %c0_i32_1 = arith.constant 0 : i32
    return %c0_i32, %c0_i32_0 : i32, i32
  }
  func.func @transform_7(%arg0: i32) -> (i32, i32) {
    %c0_i32 = arith.constant 0 : i32
    %c0_i32_0 = arith.constant 0 : i32
    return %c0_i32, %arg0 : i32, i32
  }
}

</mosaic_0001>

<llo_original>
// kernel: deepfm_forward.1
$region0: #{deepfm_forward.1}
  #allocation0 [shape = 'u32[]', space=smem, size = 0x4, offset = 0x4, fixed_abs, tag = 'smem constant byte address 0x4 - core index']
  #allocation1 [shape = 'u32[72,128]{1,0:T(1,128)}', space=vmem, size = 0x9000, scoped, tag = 'internal scratch']
  %s0 = inlined_call_operand.vmem [shape: bf16[128,512], index: 0, kind: input, shape index: {}]
  %s1 = inlined_call_operand.vmem [shape: bf16[128,128], index: 1, kind: input, shape index: {}]
  %s2 = inlined_call_operand.vmem [shape: bf16[256,48], index: 2, kind: input, shape index: {}]
  %s3 = inlined_call_operand.vmem [shape: f32[256,1], index: 3, kind: input, shape index: {}]
  %s4 = inlined_call_operand.vmem [shape: bf16[128,256], index: 4, kind: input, shape index: {}]
  %s5 = inlined_call_operand.vmem [shape: f32[128,1], index: 5, kind: input, shape index: {}]
  %s6 = inlined_call_operand.vmem [shape: f32[128,1], index: 6, kind: input, shape index: {}]
  %s7 = inlined_call_operand.hbm [shape: f32[1,512], index: 7, kind: output, shape index: {}]
  %s8 = sld [smem:[#allocation0]]
  $region38: #{deepfm_forward.1} parent=0
    _
  %s10 = ssub.s32 1, %s8
  %s11 = scalar_select 0, %s10, %s8
  $region1: #{deepfm_forward.1} parent=0
    #allocation2 [shape = 'u8[2048]{0}', space=vmem, size = 0x800, scoped, tag = 'output window, operand 0, single buffered']
    #allocation3 [shape = 's32[1]{0}', space=sflag, size = 0x4, scoped, tag = 'scoped memory for deepfm_forward.1']
    %12 = vsyncpa [#allocation3], 0
    // Predicated region
    $region2: #{deepfm_forward.1} parent=1 // pred_check
      _
    $region3: #{deepfm_forward.1} parent=1 // pred_check_branch
      %14 = sbr.rel (0) target = $region5
    $region4: #{deepfm_forward.1} parent=1 // pred_region
      _
    $region5: #{deepfm_forward.1} parent=1 // pred_fallthru
      _
    // Predicated region
    $region6: #{deepfm_forward.1} parent=1 // pred_check
      _
    $region7: #{deepfm_forward.1} parent=1 // pred_check_branch
      %16 = sbr.rel (0) target = $region9
    $region8: #{deepfm_forward.1} parent=1 // pred_region
      _
    $region9: #{deepfm_forward.1} parent=1 // pred_fallthru
      _
    // Predicated region
    $region10: #{deepfm_forward.1} parent=1 // pred_check
      _
    $region11: #{deepfm_forward.1} parent=1 // pred_check_branch
      %18 = sbr.rel (0) target = $region13
    $region12: #{deepfm_forward.1} parent=1 // pred_region
      _
    $region13: #{deepfm_forward.1} parent=1 // pred_fallthru
      _
    // Predicated region
    $region14: #{deepfm_forward.1} parent=1 // pred_check
      _
    $region15: #{deepfm_forward.1} parent=1 // pred_check_branch
      %20 = sbr.rel (0) target = $region17
    $region16: #{deepfm_forward.1} parent=1 // pred_region
      _
    $region17: #{deepfm_forward.1} parent=1 // pred_fallthru
      _
    // Predicated region
    $region18: #{deepfm_forward.1} parent=1 // pred_check
      _
    $region19: #{deepfm_forward.1} parent=1 // pred_check_branch
      %22 = sbr.rel (0) target = $region21
    $region20: #{deepfm_forward.1} parent=1 // pred_region
      _
    $region21: #{deepfm_forward.1} parent=1 // pred_fallthru
      _
    // Predicated region
    $region22: #{deepfm_forward.1} parent=1 // pred_check
      _
    $region23: #{deepfm_forward.1} parent=1 // pred_check_branch
      %24 = sbr.rel (0) target = $region25
    $region24: #{deepfm_forward.1} parent=1 // pred_region
      _
    $region25: #{deepfm_forward.1} parent=1 // pred_fallthru
      _
    // Predicated region
    $region26: #{deepfm_forward.1} parent=1 // pred_check
      _
    $region27: #{deepfm_forward.1} parent=1 // pred_check_branch
      %26 = sbr.rel (0) target = $region29
    $region28: #{deepfm_forward.1} parent=1 // pred_region
      _
    $region29: #{deepfm_forward.1} parent=1 // pred_fallthru
      _
    %v28 = vld [vmem:[%s0] sm:$0xff]
    %v29 = vld [vmem:[%s0 + $0x8] sm:$0xff]
    %v30 = vld [vmem:[%s0 + $0x10] sm:$0xff]
    %v31 = vld [vmem:[%s0 + $0x18] sm:$0xff]
    %v32 = vld [vmem:[%s0 + $0x20] sm:$0xff]
    %v33 = vld [vmem:[%s0 + $0x28] sm:$0xff]
    %v34 = vld [vmem:[%s0 + $0x30] sm:$0xff]
    %v35 = vld [vmem:[%s0 + $0x38] sm:$0xff]
    %v36 = vld [vmem:[%s0 + $0x40] sm:$0xff]
    %v37 = vld [vmem:[%s0 + $0x48] sm:$0xff]
    %v38 = vld [vmem:[%s0 + $0x50] sm:$0xff]
    %v39 = vld [vmem:[%s0 + $0x58] sm:$0xff]
    %v40 = vld [vmem:[%s0 + $0x60] sm:$0xff]
    %v41 = vld [vmem:[%s0 + $0x68] sm:$0xff]
    %v42 = vld [vmem:[%s0 + $0x70] sm:$0xff]
    %v43 = vld [vmem:[%s0 + $0x78] sm:$0xff]
    %v44 = vld [vmem:[%s0 + $0x80] sm:$0xff]
    %v45 = vld [vmem:[%s0 + $0x88] sm:$0xff]
    %v46 = vld [vmem:[%s0 + $0x90] sm:$0xff]
    %v47 = vld [vmem:[%s0 + $0x98] sm:$0xff]
    %v48 = vld [vmem:[%s0 + $0xa0] sm:$0xff]
    %v49 = vld [vmem:[%s0 + $0xa8] sm:$0xff]
    %v50 = vld [vmem:[%s0 + $0xb0] sm:$0xff]
    %v51 = vld [vmem:[%s0 + $0xb8] sm:$0xff]
    %v52 = vld [vmem:[%s0 + $0xc0] sm:$0xff]
    %v53 = vld [vmem:[%s0 + $0xc8] sm:$0xff]
    %v54 = vld [vmem:[%s0 + $0xd0] sm:$0xff]
    %v55 = vld [vmem:[%s0 + $0xd8] sm:$0xff]
    %v56 = vld [vmem:[%s0 + $0xe0] sm:$0xff]
    %v57 = vld [vmem:[%s0 + $0xe8] sm:$0xff]
    %v58 = vld [vmem:[%s0 + $0xf0] sm:$0xff]
    %v59 = vld [vmem:[%s0 + $0xf8] sm:$0xff]
    %v60 = vld [vmem:[%s1] sm:$0xf]
    %v61 = vld [vmem:[%s1 + $0x4] sm:$0xf]
    %v62 = vld [vmem:[%s1 + $0x8] sm:$0xf]
    %v63 = vld [vmem:[%s1 + $0xc] sm:$0xf]
    %v64 = vld [vmem:[%s1 + $0x10] sm:$0xf]
    %v65 = vld [vmem:[%s1 + $0x14] sm:$0xf]
    %v66 = vld [vmem:[%s1 + $0x18] sm:$0xf]
    %v67 = vld [vmem:[%s1 + $0x1c] sm:$0xf]
    %v68 = vld [vmem:[%s1 + $0x20] sm:$0xf]
    %v69 = vld [vmem:[%s1 + $0x24] sm:$0xf]
    %v70 = vld [vmem:[%s1 + $0x28] sm:$0xf]
    %v71 = vld [vmem:[%s1 + $0x2c] sm:$0xf]
    %v72 = vld [vmem:[%s1 + $0x30] sm:$0xf]
    %v73 = vld [vmem:[%s1 + $0x34] sm:$0xf]
    %v74 = vld [vmem:[%s1 + $0x38] sm:$0xf]
    %v75 = vld [vmem:[%s1 + $0x3c] sm:$0xf]
    %v92 = vunpack.c.l.b16 %v60
    %v93 = vunpack.c.l.b16 %v61
    %v94 = vunpack.c.l.b16 %v62
    %v95 = vunpack.c.l.b16 %v63
    %v96 = vunpack.c.l.b16 %v64
    %v97 = vunpack.c.l.b16 %v65
    %v98 = vunpack.c.l.b16 %v66
    %v99 = vunpack.c.l.b16 %v67
    %v100 = vunpack.c.l.b16 %v68
    %v101 = vunpack.c.l.b16 %v69
    %v102 = vunpack.c.l.b16 %v70
    %v103 = vunpack.c.l.b16 %v71
    %v104 = vunpack.c.l.b16 %v72
    %v105 = vunpack.c.l.b16 %v73
    %v106 = vunpack.c.l.b16 %v74
    %v107 = vunpack.c.l.b16 %v75
    %v108 = vpack.c.b16 %v93, %v92
    %v109 = vpack.c.b16 %v95, %v94
    %v110 = vpack.c.b16 %v97, %v96
    %v111 = vpack.c.b16 %v99, %v98
    %v112 = vpack.c.b16 %v101, %v100
    %v113 = vpack.c.b16 %v103, %v102
    %v114 = vpack.c.b16 %v105, %v104
    %v115 = vpack.c.b16 %v107, %v106
    %v156 = vunpack.c.l.b16 %v28
    %v157 = vunpack.c.h.b16 %v28
    %v158 = vunpack.c.l.b16 %v29
    %v159 = vunpack.c.h.b16 %v29
    %v160 = vunpack.c.l.b16 %v30
    %v161 = vunpack.c.h.b16 %v30
    %v162 = vunpack.c.l.b16 %v31
    %v163 = vunpack.c.h.b16 %v31
    %v164 = vunpack.c.l.b16 %v32
    %v165 = vunpack.c.h.b16 %v32
    %v166 = vunpack.c.l.b16 %v33
    %v167 = vunpack.c.h.b16 %v33
    %v168 = vunpack.c.l.b16 %v34
    %v169 = vunpack.c.h.b16 %v34
    %v170 = vunpack.c.l.b16 %v35
    %v171 = vunpack.c.h.b16 %v35
    %v172 = vunpack.c.l.b16 %v36
    %v173 = vunpack.c.h.b16 %v36
    %v174 = vunpack.c.l.b16 %v37
    %v175 = vunpack.c.h.b16 %v37
    %v176 = vunpack.c.l.b16 %v38
    %v177 = vunpack.c.h.b16 %v38
    %v178 = vunpack.c.l.b16 %v39
    %v179 = vunpack.c.h.b16 %v39
    %v180 = vunpack.c.l.b16 %v40
    %v181 = vunpack.c.h.b16 %v40
    %v182 = vunpack.c.l.b16 %v41
    %v183 = vunpack.c.h.b16 %v41
    %v184 = vunpack.c.l.b16 %v42
    %v185 = vunpack.c.h.b16 %v42
    %v186 = vunpack.c.l.b16 %v43
    %v187 = vunpack.c.h.b16 %v43
    %v188 = vunpack.c.l.b16 %v44
    %v189 = vunpack.c.h.b16 %v44
    %v190 = vunpack.c.l.b16 %v45
    %v191 = vunpack.c.h.b16 %v45
    %v192 = vunpack.c.l.b16 %v46
    %v193 = vunpack.c.h.b16 %v46
    %v194 = vunpack.c.l.b16 %v47
    %v195 = vunpack.c.h.b16 %v47
    %v196 = vunpack.c.l.b16 %v48
    %v197 = vunpack.c.h.b16 %v48
    %v198 = vunpack.c.l.b16 %v49
    %v199 = vunpack.c.h.b16 %v49
    %v200 = vunpack.c.l.b16 %v50
    %v201 = vunpack.c.h.b16 %v50
    %v202 = vunpack.c.l.b16 %v51
    %v203 = vunpack.c.h.b16 %v51
    %v204 = vunpack.c.l.b16 %v52
    %v205 = vunpack.c.h.b16 %v52
    %v206 = vunpack.c.l.b16 %v53
    %v207 = vunpack.c.h.b16 %v53
    %v208 = vunpack.c.l.b16 %v54
    %v209 = vunpack.c.h.b16 %v54
    %v210 = vunpack.c.l.b16 %v55
    %v211 = vunpack.c.h.b16 %v55
    %v212 = vunpack.c.l.b16 %v56
    %v213 = vunpack.c.h.b16 %v56
    %v214 = vunpack.c.l.b16 %v57
    %v215 = vunpack.c.h.b16 %v57
    %v216 = vunpack.c.l.b16 %v58
    %v217 = vunpack.c.h.b16 %v58
    %v218 = vunpack.c.l.b16 %v59
    %v219 = vunpack.c.h.b16 %v59
    %v220 = vpack.c.b16 %v160, %v156
    %v221 = vpack.c.b16 %v161, %v157
    %v222 = vpack.c.b16 %v162, %v158
    %v223 = vpack.c.b16 %v163, %v159
    %v224 = vpack.c.b16 %v168, %v164
    %v225 = vpack.c.b16 %v169, %v165
    %v226 = vpack.c.b16 %v170, %v166
    %v227 = vpack.c.b16 %v171, %v167
    %v228 = vpack.c.b16 %v176, %v172
    %v229 = vpack.c.b16 %v177, %v173
    %v230 = vpack.c.b16 %v178, %v174
    %v231 = vpack.c.b16 %v179, %v175
    %v232 = vpack.c.b16 %v184, %v180
    %v233 = vpack.c.b16 %v185, %v181
    %v234 = vpack.c.b16 %v186, %v182
    %v235 = vpack.c.b16 %v187, %v183
    %v236 = vpack.c.b16 %v192, %v188
    %v237 = vpack.c.b16 %v193, %v189
    %v238 = vpack.c.b16 %v194, %v190
    %v239 = vpack.c.b16 %v195, %v191
    %v240 = vpack.c.b16 %v200, %v196
    %v241 = vpack.c.b16 %v201, %v197
    %v242 = vpack.c.b16 %v202, %v198
    %v243 = vpack.c.b16 %v203, %v199
    %v244 = vpack.c.b16 %v208, %v204
    %v245 = vpack.c.b16 %v209, %v205
    %v246 = vpack.c.b16 %v210, %v206
    %v247 = vpack.c.b16 %v211, %v207
    %v248 = vpack.c.b16 %v216, %v212
    %v249 = vpack.c.b16 %v217, %v213
    %v250 = vpack.c.b16 %v218, %v214
    %v251 = vpack.c.b16 %v219, %v215
    %284 = vmatpush.bf16.msra.mxu0 %v248
    %285 = vmatpush.bf16.msra.mxu0 %v244
    %286 = vmatpush.bf16.msra.mxu0 %v240
    %287 = vmatpush.bf16.msra.mxu0 %v236
    %288 = vmatpush.bf16.msra.mxu0 %v232
    %289 = vmatpush.bf16.msra.mxu0 %v228
    %290 = vmatpush.bf16.msra.mxu0 %v224
    %291 = vmatpush.bf16.msra.mxu0 %v220
    %292 = vmatmul.bf16.gmra.mxu0 %v108
    %v293 = vpop.f32.mrf.mxu0
    %v294 = vadd.f32 0.0, %v293
    %v295 = vpop.f32.mrf.mxu0
    %v296 = vadd.f32 0.0, %v295
    %297 = vmatmul.bf16.gmra.mxu0 %v109
    %v298 = vpop.f32.mrf.mxu0
    %v299 = vadd.f32 0.0, %v298
    %v300 = vpop.f32.mrf.mxu0
    %v301 = vadd.f32 0.0, %v300
    %302 = vmatmul.bf16.gmra.mxu0 %v110
    %v303 = vpop.f32.mrf.mxu0
    %v304 = vadd.f32 0.0, %v303
    %v305 = vpop.f32.mrf.mxu0
    %v306 = vadd.f32 0.0, %v305
    %307 = vmatmul.bf16.gmra.mxu0 %v111
    %v308 = vpop.f32.mrf.mxu0
    %v309 = vadd.f32 0.0, %v308
    %v310 = vpop.f32.mrf.mxu0
    %v311 = vadd.f32 0.0, %v310
    %312 = vmatmul.bf16.gmra.mxu0 %v112
    %v313 = vpop.f32.mrf.mxu0
    %v314 = vadd.f32 0.0, %v313
    %v315 = vpop.f32.mrf.mxu0
    %v316 = vadd.f32 0.0, %v315
    %317 = vmatmul.bf16.gmra.mxu0 %v113
    %v318 = vpop.f32.mrf.mxu0
    %v319 = vadd.f32 0.0, %v318
    %v320 = vpop.f32.mrf.mxu0
    %v321 = vadd.f32 0.0, %v320
    %322 = vmatmul.bf16.gmra.mxu0 %v114
    %v323 = vpop.f32.mrf.mxu0
    %v324 = vadd.f32 0.0, %v323
    %v325 = vpop.f32.mrf.mxu0
    %326 = vmatmul.bf16.gmra.mxu0 %v115
    %v327 = vpop.f32.mrf.mxu0
    %v328 = vpop.f32.mrf.mxu0
    %329 = vdwg.mxu0
    %330 = vmatpush.bf16.msra.mxu0 %v249
    %331 = vmatpush.bf16.msra.mxu0 %v245
    %332 = vmatpush.bf16.msra.mxu0 %v241
    %333 = vmatpush.bf16.msra.mxu0 %v237
    %334 = vmatpush.bf16.msra.mxu0 %v233
    %335 = vmatpush.bf16.msra.mxu0 %v229
    %336 = vmatpush.bf16.msra.mxu0 %v225
    %337 = vmatpush.bf16.msra.mxu0 %v221
    %338 = vmatmul.bf16.gmra.mxu0 %v108
    %v339 = vpop.f32.mrf.mxu0
    %v340 = vadd.f32 0.0, %v339
    %v341 = vpop.f32.mrf.mxu0
    %v342 = vadd.f32 0.0, %v341
    %343 = vmatmul.bf16.gmra.mxu0 %v109
    %v344 = vpop.f32.mrf.mxu0
    %v345 = vadd.f32 0.0, %v344
    %v346 = vpop.f32.mrf.mxu0
    %v347 = vadd.f32 0.0, %v346
    %348 = vmatmul.bf16.gmra.mxu0 %v110
    %v349 = vpop.f32.mrf.mxu0
    %v350 = vadd.f32 0.0, %v349
    %v351 = vpop.f32.mrf.mxu0
    %v352 = vadd.f32 0.0, %v351
    %353 = vmatmul.bf16.gmra.mxu0 %v111
    %v354 = vpop.f32.mrf.mxu0
    %v355 = vadd.f32 0.0, %v354
    %v356 = vpop.f32.mrf.mxu0
    %v357 = vadd.f32 0.0, %v356
    %358 = vmatmul.bf16.gmra.mxu0 %v112
    %v359 = vpop.f32.mrf.mxu0
    %v360 = vadd.f32 0.0, %v359
    %v361 = vpop.f32.mrf.mxu0
    %v362 = vadd.f32 0.0, %v361
    %363 = vmatmul.bf16.gmra.mxu0 %v113
    %v364 = vpop.f32.mrf.mxu0
    %v365 = vadd.f32 0.0, %v364
    %v366 = vpop.f32.mrf.mxu0
    %v367 = vadd.f32 0.0, %v366
    %368 = vmatmul.bf16.gmra.mxu0 %v114
    %v369 = vpop.f32.mrf.mxu0
    %v370 = vadd.f32 0.0, %v369
    %v371 = vpop.f32.mrf.mxu0
    %372 = vmatmul.bf16.gmra.mxu0 %v115
    %v373 = vpop.f32.mrf.mxu0
    %v374 = vpop.f32.mrf.mxu0
    %375 = vdwg.mxu0
    %376 = vmatpush.bf16.msra.mxu0 %v250
    %377 = vmatpush.bf16.msra.mxu0 %v246
    %378 = vmatpush.bf16.msra.mxu0 %v242
    %379 = vmatpush.bf16.msra.mxu0 %v238
    %380 = vmatpush.bf16.msra.mxu0 %v234
    %381 = vmatpush.bf16.msra.mxu0 %v230
    %382 = vmatpush.bf16.msra.mxu0 %v226
    %383 = vmatpush.bf16.msra.mxu0 %v222
    %384 = vmatmul.bf16.gmra.mxu0 %v108
    %v385 = vpop.f32.mrf.mxu0
    %v386 = vadd.f32 0.0, %v385
    %v387 = vpop.f32.mrf.mxu0
    %v388 = vadd.f32 0.0, %v387
    %389 = vmatmul.bf16.gmra.mxu0 %v109
    %v390 = vpop.f32.mrf.mxu0
    %v391 = vadd.f32 0.0, %v390
    %v392 = vpop.f32.mrf.mxu0
    %v393 = vadd.f32 0.0, %v392
    %394 = vmatmul.bf16.gmra.mxu0 %v110
    %v395 = vpop.f32.mrf.mxu0
    %v396 = vadd.f32 0.0, %v395
    %v397 = vpop.f32.mrf.mxu0
    %v398 = vadd.f32 0.0, %v397
    %399 = vmatmul.bf16.gmra.mxu0 %v111
    %v400 = vpop.f32.mrf.mxu0
    %v401 = vadd.f32 0.0, %v400
    %v402 = vpop.f32.mrf.mxu0
    %v403 = vadd.f32 0.0, %v402
    %404 = vmatmul.bf16.gmra.mxu0 %v112
    %v405 = vpop.f32.mrf.mxu0
    %v406 = vadd.f32 0.0, %v405
    %v407 = vpop.f32.mrf.mxu0
    %v408 = vadd.f32 0.0, %v407
    %409 = vmatmul.bf16.gmra.mxu0 %v113
    %v410 = vpop.f32.mrf.mxu0
    %v411 = vadd.f32 0.0, %v410
    %v412 = vpop.f32.mrf.mxu0
    %v413 = vadd.f32 0.0, %v412
    %414 = vmatmul.bf16.gmra.mxu0 %v114
    %v415 = vpop.f32.mrf.mxu0
    %v416 = vadd.f32 0.0, %v415
    %v417 = vpop.f32.mrf.mxu0
    %418 = vmatmul.bf16.gmra.mxu0 %v115
    %v419 = vpop.f32.mrf.mxu0
    %v420 = vpop.f32.mrf.mxu0
    %421 = vdwg.mxu0
    %422 = vmatpush.bf16.msra.mxu0 %v251
    %423 = vmatpush.bf16.msra.mxu0 %v247
    %424 = vmatpush.bf16.msra.mxu0 %v243
    %425 = vmatpush.bf16.msra.mxu0 %v239
    %426 = vmatpush.bf16.msra.mxu0 %v235
    %427 = vmatpush.bf16.msra.mxu0 %v231
    %428 = vmatpush.bf16.msra.mxu0 %v227
    %429 = vmatpush.bf16.msra.mxu0 %v223
    %430 = vmatmul.bf16.gmra.mxu0 %v108
    %v431 = vpop.f32.mrf.mxu0
    %v432 = vadd.f32 0.0, %v431
    %v433 = vpop.f32.mrf.mxu0
    %v434 = vadd.f32 0.0, %v433
    %435 = vmatmul.bf16.gmra.mxu0 %v109
    %v436 = vpop.f32.mrf.mxu0
    %v437 = vadd.f32 0.0, %v436
    %v438 = vpop.f32.mrf.mxu0
    %v439 = vadd.f32 0.0, %v438
    %440 = vmatmul.bf16.gmra.mxu0 %v110
    %v441 = vpop.f32.mrf.mxu0
    %v442 = vadd.f32 0.0, %v441
    %v443 = vpop.f32.mrf.mxu0
    %v444 = vadd.f32 0.0, %v443
    %445 = vmatmul.bf16.gmra.mxu0 %v111
    %v446 = vpop.f32.mrf.mxu0
    %v447 = vadd.f32 0.0, %v446
    %v448 = vpop.f32.mrf.mxu0
    %v449 = vadd.f32 0.0, %v448
    %450 = vmatmul.bf16.gmra.mxu0 %v112
    %v451 = vpop.f32.mrf.mxu0
    %v452 = vadd.f32 0.0, %v451
    %v453 = vpop.f32.mrf.mxu0
    %v454 = vadd.f32 0.0, %v453
    %455 = vmatmul.bf16.gmra.mxu0 %v113
    %v456 = vpop.f32.mrf.mxu0
    %v457 = vadd.f32 0.0, %v456
    %v458 = vpop.f32.mrf.mxu0
    %v459 = vadd.f32 0.0, %v458
    %460 = vmatmul.bf16.gmra.mxu0 %v114
    %v461 = vpop.f32.mrf.mxu0
    %v462 = vadd.f32 0.0, %v461
    %v463 = vpop.f32.mrf.mxu0
    %464 = vmatmul.bf16.gmra.mxu0 %v115
    %v465 = vpop.f32.mrf.mxu0
    %v466 = vpop.f32.mrf.mxu0
    %467 = vdwg.mxu0
    %v468 = vunpack.c.l.bf16 %v28
    %v469 = vunpack.c.h.bf16 %v28
    %v470 = vunpack.c.l.bf16 %v29
    %v471 = vunpack.c.h.bf16 %v29
    %v472 = vunpack.c.l.bf16 %v30
    %v473 = vunpack.c.h.bf16 %v30
    %v474 = vunpack.c.l.bf16 %v31
    %v475 = vunpack.c.h.bf16 %v31
    %v476 = vunpack.c.l.bf16 %v32
    %v477 = vunpack.c.h.bf16 %v32
    %v478 = vunpack.c.l.bf16 %v33
    %v479 = vunpack.c.h.bf16 %v33
    %v480 = vunpack.c.l.bf16 %v34
    %v481 = vunpack.c.h.bf16 %v34
    %v482 = vunpack.c.l.bf16 %v35
    %v483 = vunpack.c.h.bf16 %v35
    %v484 = vunpack.c.l.bf16 %v36
    %v485 = vunpack.c.h.bf16 %v36
    %v486 = vunpack.c.l.bf16 %v37
    %v487 = vunpack.c.h.bf16 %v37
    %v488 = vunpack.c.l.bf16 %v38
    %v489 = vunpack.c.h.bf16 %v38
    %v490 = vunpack.c.l.bf16 %v39
    %v491 = vunpack.c.h.bf16 %v39
    %v492 = vmax.f32 %v294, 0.0
    %v493 = vmax.f32 %v340, 0.0
    %v494 = vmax.f32 %v386, 0.0
    %v495 = vmax.f32 %v432, 0.0
    %v496 = vmax.f32 %v296, 0.0
    %v497 = vmax.f32 %v342, 0.0
    %v498 = vmax.f32 %v388, 0.0
    %v499 = vmax.f32 %v434, 0.0
    %v500 = vmax.f32 %v299, 0.0
    %v501 = vmax.f32 %v345, 0.0
    %v502 = vmax.f32 %v391, 0.0
    %v503 = vmax.f32 %v437, 0.0
    %v504 = vmax.f32 %v301, 0.0
    %v505 = vmax.f32 %v347, 0.0
    %v506 = vmax.f32 %v393, 0.0
    %v507 = vmax.f32 %v439, 0.0
    %v508 = vmax.f32 %v304, 0.0
    %v509 = vmax.f32 %v350, 0.0
    %v510 = vmax.f32 %v396, 0.0
    %v511 = vmax.f32 %v442, 0.0
    %v512 = vmax.f32 %v306, 0.0
    %v513 = vmax.f32 %v352, 0.0
    %v514 = vmax.f32 %v398, 0.0
    %v515 = vmax.f32 %v444, 0.0
    %v516 = vmul.f32 %v309, %v468
    %v517 = vmul.f32 %v355, %v469
    %v518 = vmul.f32 %v401, %v470
    %v519 = vmul.f32 %v447, %v471
    %v520 = vmul.f32 %v311, %v472
    %v521 = vmul.f32 %v357, %v473
    %v522 = vmul.f32 %v403, %v474
    %v523 = vmul.f32 %v449, %v475
    %v524 = vmul.f32 %v314, %v476
    %v525 = vmul.f32 %v360, %v477
    %v526 = vmul.f32 %v406, %v478
    %v527 = vmul.f32 %v452, %v479
    %v528 = vmul.f32 %v316, %v480
    %v529 = vmul.f32 %v362, %v481
    %v530 = vmul.f32 %v408, %v482
    %v531 = vmul.f32 %v454, %v483
    %v532 = vmul.f32 %v319, %v484
    %v533 = vmul.f32 %v365, %v485
    %v534 = vmul.f32 %v411, %v486
    %v535 = vmul.f32 %v457, %v487
    %v536 = vmul.f32 %v321, %v488
    %v537 = vmul.f32 %v367, %v489
    %v538 = vmul.f32 %v413, %v490
    %v539 = vmul.f32 %v459, %v491
    %v540 = vadd.f32 %v516, %v520
    %v541 = vadd.f32 %v540, %v524
    %v542 = vadd.f32 %v541, %v528
    %v543 = vadd.f32 %v542, %v532
    %v544 = vadd.f32 %v543, %v536
    %v545 = vrot.slane %v544, 4
    %v546 = vadd.f32 %v544, %v545
    %v547 = vrot.slane %v546, 2
    %v548 = vadd.f32 %v546, %v547
    %v549 = vrot.slane %v548, 1
    %v550 = vadd.f32 %v548, %v549
    %v551 = vadd.f32 %v517, %v521
    %v552 = vadd.f32 %v551, %v525
    %v553 = vadd.f32 %v552, %v529
    %v554 = vadd.f32 %v553, %v533
    %v555 = vadd.f32 %v554, %v537
    %v556 = vrot.slane %v555, 4
    %v557 = vadd.f32 %v555, %v556
    %v558 = vrot.slane %v557, 2
    %v559 = vadd.f32 %v557, %v558
    %v560 = vrot.slane %v559, 1
    %v561 = vadd.f32 %v559, %v560
    %v562 = vadd.f32 %v518, %v522
    %v563 = vadd.f32 %v562, %v526
    %v564 = vadd.f32 %v563, %v530
    %v565 = vadd.f32 %v564, %v534
    %v566 = vadd.f32 %v565, %v538
    %v567 = vrot.slane %v566, 4
    %v568 = vadd.f32 %v566, %v567
    %v569 = vrot.slane %v568, 2
    %v570 = vadd.f32 %v568, %v569
    %v571 = vrot.slane %v570, 1
    %v572 = vadd.f32 %v570, %v571
    %v573 = vadd.f32 %v519, %v523
    %v574 = vadd.f32 %v573, %v527
    %v575 = vadd.f32 %v574, %v531
    %v576 = vadd.f32 %v575, %v535
    %v577 = vadd.f32 %v576, %v539
    %v578 = vrot.slane %v577, 4
    %v579 = vadd.f32 %v577, %v578
    %v580 = vrot.slane %v579, 2
    %v581 = vadd.f32 %v579, %v580
    %v582 = vrot.slane %v581, 1
    %v583 = vadd.f32 %v581, %v582
    %v584 = vmul.f32 %v550, 0.5
    %v585 = vmul.f32 %v561, 0.5
    %v586 = vmul.f32 %v572, 0.5
    %v587 = vmul.f32 %v583, 0.5
    %v588 = vadd.f32 %v468, %v492
    %v589 = vadd.f32 %v469, %v493
    %v590 = vadd.f32 %v470, %v494
    %v591 = vadd.f32 %v471, %v495
    %v592 = vadd.f32 %v472, %v496
    %v593 = vadd.f32 %v473, %v497
    %v594 = vadd.f32 %v474, %v498
    %v595 = vadd.f32 %v475, %v499
    %v596 = vadd.f32 %v476, %v500
    %v597 = vadd.f32 %v477, %v501
    %v598 = vadd.f32 %v478, %v502
    %v599 = vadd.f32 %v479, %v503
    %v600 = vadd.f32 %v480, %v504
    %v601 = vadd.f32 %v481, %v505
    %v602 = vadd.f32 %v482, %v506
    %v603 = vadd.f32 %v483, %v507
    %v604 = vadd.f32 %v484, %v508
    %v605 = vadd.f32 %v485, %v509
    %v606 = vadd.f32 %v486, %v510
    %v607 = vadd.f32 %v487, %v511
    %v608 = vadd.f32 %v488, %v512
    %v609 = vadd.f32 %v489, %v513
    %v610 = vadd.f32 %v490, %v514
    %v611 = vadd.f32 %v491, %v515
    %v612 = vpack.c.bf16 %v592, %v588
    %v613 = vpack.c.bf16 %v593, %v589
    %v614 = vpack.c.bf16 %v594, %v590
    %v615 = vpack.c.bf16 %v595, %v591
    %v616 = vpack.c.bf16 %v600, %v596
    %v617 = vpack.c.bf16 %v601, %v597
    %v618 = vpack.c.bf16 %v602, %v598
    %v619 = vpack.c.bf16 %v603, %v599
    %v620 = vpack.c.bf16 %v608, %v604
    %v621 = vpack.c.bf16 %v609, %v605
    %v622 = vpack.c.bf16 %v610, %v606
    %v623 = vpack.c.bf16 %v611, %v607
    %v624 = vld [vmem:[%s2] sm:$0xf]
    %v625 = vld [vmem:[%s2 + $0x4] sm:$0xf]
    %v626 = vld [vmem:[%s2 + $0x8] sm:$0xf]
    %v627 = vld [vmem:[%s2 + $0xc] sm:$0xf]
    %v628 = vld [vmem:[%s2 + $0x10] sm:$0xf]
    %v629 = vld [vmem:[%s2 + $0x14] sm:$0xf]
    %v630 = vld [vmem:[%s2 + $0x18] sm:$0xf]
    %v631 = vld [vmem:[%s2 + $0x1c] sm:$0xf]
    %v632 = vld [vmem:[%s2 + $0x20] sm:$0xf]
    %v633 = vld [vmem:[%s2 + $0x24] sm:$0xf]
    %v634 = vld [vmem:[%s2 + $0x28] sm:$0xf]
    %v635 = vld [vmem:[%s2 + $0x2c] sm:$0xf]
    %v636 = vld [vmem:[%s2 + $0x30] sm:$0xf]
    %v637 = vld [vmem:[%s2 + $0x34] sm:$0xf]
    %v638 = vld [vmem:[%s2 + $0x38] sm:$0xf]
    %v639 = vld [vmem:[%s2 + $0x3c] sm:$0xf]
    %v640 = vld [vmem:[%s2 + $0x40] sm:$0xf]
    %v641 = vld [vmem:[%s2 + $0x44] sm:$0xf]
    %v642 = vld [vmem:[%s2 + $0x48] sm:$0xf]
    %v643 = vld [vmem:[%s2 + $0x4c] sm:$0xf]
    %v644 = vld [vmem:[%s2 + $0x50] sm:$0xf]
    %v645 = vld [vmem:[%s2 + $0x54] sm:$0xf]
    %v646 = vld [vmem:[%s2 + $0x58] sm:$0xf]
    %v647 = vld [vmem:[%s2 + $0x5c] sm:$0xf]
    %v648 = vld [vmem:[%s2 + $0x60] sm:$0xf]
    %v649 = vld [vmem:[%s2 + $0x64] sm:$0xf]
    %v650 = vld [vmem:[%s2 + $0x68] sm:$0xf]
    %v651 = vld [vmem:[%s2 + $0x6c] sm:$0xf]
    %v652 = vld [vmem:[%s2 + $0x70] sm:$0xf]
    %v653 = vld [vmem:[%s2 + $0x74] sm:$0xf]
    %v654 = vld [vmem:[%s2 + $0x78] sm:$0xf]
    %v655 = vld [vmem:[%s2 + $0x7c] sm:$0xf]
    %v656 = vld [vmem:[%s3] sm:$0xff]
    %v657 = vld [vmem:[%s3 + $0x8] sm:$0xff]
    %v658 = vld [vmem:[%s3 + $0x10] sm:$0xff]
    %v659 = vld [vmem:[%s3 + $0x18] sm:$0xff]
    %v660 = vld [vmem:[%s3 + $0x20] sm:$0xff]
    %v661 = vld [vmem:[%s3 + $0x28] sm:$0xff]
    %v662 = vld [vmem:[%s3 + $0x30] sm:$0xff]
    %v663 = vld [vmem:[%s3 + $0x38] sm:$0xff]
    %v664 = vld [vmem:[%s3 + $0x40] sm:$0xff]
    %v665 = vld [vmem:[%s3 + $0x48] sm:$0xff]
    %v666 = vld [vmem:[%s3 + $0x50] sm:$0xff]
    %v667 = vld [vmem:[%s3 + $0x58] sm:$0xff]
    %v668 = vld [vmem:[%s3 + $0x60] sm:$0xff]
    %v669 = vld [vmem:[%s3 + $0x68] sm:$0xff]
    %v670 = vld [vmem:[%s3 + $0x70] sm:$0xff]
    %v671 = vld [vmem:[%s3 + $0x78] sm:$0xff]
    %v672 = vld [vmem:[%s3 + $0x80] sm:$0xff]
    %v673 = vld [vmem:[%s3 + $0x88] sm:$0xff]
    %v674 = vld [vmem:[%s3 + $0x90] sm:$0xff]
    %v675 = vld [vmem:[%s3 + $0x98] sm:$0xff]
    %v676 = vld [vmem:[%s3 + $0xa0] sm:$0xff]
    %v677 = vld [vmem:[%s3 + $0xa8] sm:$0xff]
    %v678 = vld [vmem:[%s3 + $0xb0] sm:$0xff]
    %v679 = vld [vmem:[%s3 + $0xb8] sm:$0xff]
    %v680 = vld [vmem:[%s3 + $0xc0] sm:$0xff]
    %v681 = vld [vmem:[%s3 + $0xc8] sm:$0xff]
    %v682 = vld [vmem:[%s3 + $0xd0] sm:$0xff]
    %v683 = vld [vmem:[%s3 + $0xd8] sm:$0xff]
    %v684 = vld [vmem:[%s3 + $0xe0] sm:$0xff]
    %v685 = vld [vmem:[%s3 + $0xe8] sm:$0xff]
    %v686 = vld [vmem:[%s3 + $0xf0] sm:$0xff]
    %v687 = vld [vmem:[%s3 + $0xf8] sm:$0xff]
    %689 = vset.pattern.permute.xlu0 0
    %690 = vperm.xlu0 %689, %v656
    %v691 = vpop.permute.xlu0 %690
    %694 = vset.pattern.permute.xlu0 0
    %695 = vperm.xlu0 %694, %v657
    %v696 = vpop.permute.xlu0 %695
    %699 = vset.pattern.permute.xlu0 0
    %700 = vperm.xlu0 %699, %v658
    %v701 = vpop.permute.xlu0 %700
    %704 = vset.pattern.permute.xlu0 0
    %705 = vperm.xlu0 %704, %v659
    %v706 = vpop.permute.xlu0 %705
    %709 = vset.pattern.permute.xlu0 0
    %710 = vperm.xlu0 %709, %v660
    %v711 = vpop.permute.xlu0 %710
    %714 = vset.pattern.permute.xlu0 0
    %715 = vperm.xlu0 %714, %v661
    %v716 = vpop.permute.xlu0 %715
    %719 = vset.pattern.permute.xlu0 0
    %720 = vperm.xlu0 %719, %v662
    %v721 = vpop.permute.xlu0 %720
    %724 = vset.pattern.permute.xlu0 0
    %725 = vperm.xlu0 %724, %v663
    %v726 = vpop.permute.xlu0 %725
    %729 = vset.pattern.permute.xlu0 0
    %730 = vperm.xlu0 %729, %v664
    %v731 = vpop.permute.xlu0 %730
    %734 = vset.pattern.permute.xlu0 0
    %735 = vperm.xlu0 %734, %v665
    %v736 = vpop.permute.xlu0 %735
    %739 = vset.pattern.permute.xlu0 0
    %740 = vperm.xlu0 %739, %v666
    %v741 = vpop.permute.xlu0 %740
    %744 = vset.pattern.permute.xlu0 0
    %745 = vperm.xlu0 %744, %v667
    %v746 = vpop.permute.xlu0 %745
    %749 = vset.pattern.permute.xlu0 0
    %750 = vperm.xlu0 %749, %v668
    %v751 = vpop.permute.xlu0 %750
    %754 = vset.pattern.permute.xlu0 0
    %755 = vperm.xlu0 %754, %v669
    %v756 = vpop.permute.xlu0 %755
    %759 = vset.pattern.permute.xlu0 0
    %760 = vperm.xlu0 %759, %v670
    %v761 = vpop.permute.xlu0 %760
    %764 = vset.pattern.permute.xlu0 0
    %765 = vperm.xlu0 %764, %v671
    %v766 = vpop.permute.xlu0 %765
    %769 = vset.pattern.permute.xlu0 0
    %770 = vperm.xlu0 %769, %v672
    %v771 = vpop.permute.xlu0 %770
    %774 = vset.pattern.permute.xlu0 0
    %775 = vperm.xlu0 %774, %v673
    %v776 = vpop.permute.xlu0 %775
    %779 = vset.pattern.permute.xlu0 0
    %780 = vperm.xlu0 %779, %v674
    %v781 = vpop.permute.xlu0 %780
    %784 = vset.pattern.permute.xlu0 0
    %785 = vperm.xlu0 %784, %v675
    %v786 = vpop.permute.xlu0 %785
    %789 = vset.pattern.permute.xlu0 0
    %790 = vperm.xlu0 %789, %v676
    %v791 = vpop.permute.xlu0 %790
    %794 = vset.pattern.permute.xlu0 0
    %795 = vperm.xlu0 %794, %v677
    %v796 = vpop.permute.xlu0 %795
    %799 = vset.pattern.permute.xlu0 0
    %800 = vperm.xlu0 %799, %v678
    %v801 = vpop.permute.xlu0 %800
    %804 = vset.pattern.permute.xlu0 0
    %805 = vperm.xlu0 %804, %v679
    %v806 = vpop.permute.xlu0 %805
    %809 = vset.pattern.permute.xlu0 0
    %810 = vperm.xlu0 %809, %v680
    %v811 = vpop.permute.xlu0 %810
    %814 = vset.pattern.permute.xlu0 0
    %815 = vperm.xlu0 %814, %v681
    %v816 = vpop.permute.xlu0 %815
    %819 = vset.pattern.permute.xlu0 0
    %820 = vperm.xlu0 %819, %v682
    %v821 = vpop.permute.xlu0 %820
    %824 = vset.pattern.permute.xlu0 0
    %825 = vperm.xlu0 %824, %v683
    %v826 = vpop.permute.xlu0 %825
    %829 = vset.pattern.permute.xlu0 0
    %830 = vperm.xlu0 %829, %v684
    %v831 = vpop.permute.xlu0 %830
    %834 = vset.pattern.permute.xlu0 0
    %835 = vperm.xlu0 %834, %v685
    %v836 = vpop.permute.xlu0 %835
    %839 = vset.pattern.permute.xlu0 0
    %840 = vperm.xlu0 %839, %v686
    %v841 = vpop.permute.xlu0 %840
    %844 = vset.pattern.permute.xlu0 0
    %845 = vperm.xlu0 %844, %v687
    %v846 = vpop.permute.xlu0 %845
    %v880 = vunpack.c.l.b16 %v624
    %v881 = vunpack.c.l.b16 %v625
    %v882 = vunpack.c.l.b16 %v626
    %v883 = vunpack.c.l.b16 %v627
    %v884 = vunpack.c.l.b16 %v628
    %v885 = vunpack.c.l.b16 %v629
    %v886 = vunpack.c.l.b16 %v630
    %v887 = vunpack.c.l.b16 %v631
    %v888 = vunpack.c.l.b16 %v632
    %v889 = vunpack.c.l.b16 %v633
    %v890 = vunpack.c.l.b16 %v634
    %v891 = vunpack.c.l.b16 %v635
    %v892 = vunpack.c.l.b16 %v636
    %v893 = vunpack.c.l.b16 %v637
    %v894 = vunpack.c.l.b16 %v638
    %v895 = vunpack.c.l.b16 %v639
    %v896 = vunpack.c.l.b16 %v640
    %v897 = vunpack.c.l.b16 %v641
    %v898 = vunpack.c.l.b16 %v642
    %v899 = vunpack.c.l.b16 %v643
    %v900 = vunpack.c.l.b16 %v644
    %v901 = vunpack.c.l.b16 %v645
    %v902 = vunpack.c.l.b16 %v646
    %v903 = vunpack.c.l.b16 %v647
    %v904 = vunpack.c.l.b16 %v648
    %v905 = vunpack.c.l.b16 %v649
    %v906 = vunpack.c.l.b16 %v650
    %v907 = vunpack.c.l.b16 %v651
    %v908 = vunpack.c.l.b16 %v652
    %v909 = vunpack.c.l.b16 %v653
    %v910 = vunpack.c.l.b16 %v654
    %v911 = vunpack.c.l.b16 %v655
    %v912 = vpack.c.b16 %v881, %v880
    %v913 = vpack.c.b16 %v883, %v882
    %v914 = vpack.c.b16 %v885, %v884
    %v915 = vpack.c.b16 %v887, %v886
    %v916 = vpack.c.b16 %v889, %v888
    %v917 = vpack.c.b16 %v891, %v890
    %v918 = vpack.c.b16 %v893, %v892
    %v919 = vpack.c.b16 %v895, %v894
    %v920 = vpack.c.b16 %v897, %v896
    %v921 = vpack.c.b16 %v899, %v898
    %v922 = vpack.c.b16 %v901, %v900
    %v923 = vpack.c.b16 %v903, %v902
    %v924 = vpack.c.b16 %v905, %v904
    %v925 = vpack.c.b16 %v907, %v906
    %v926 = vpack.c.b16 %v909, %v908
    %v927 = vpack.c.b16 %v911, %v910
    %vm928 = vcmask 392192
    %v930 = vsel %vm928, %v912, 0
    %v933 = vsel %vm928, %v913, 0
    %v936 = vsel %vm928, %v914, 0
    %v939 = vsel %vm928, %v915, 0
    %v942 = vsel %vm928, %v916, 0
    %v945 = vsel %vm928, %v917, 0
    %v948 = vsel %vm928, %v918, 0
    %v951 = vsel %vm928, %v919, 0
    %v954 = vsel %vm928, %v920, 0
    %v957 = vsel %vm928, %v921, 0
    %v960 = vsel %vm928, %v922, 0
    %v963 = vsel %vm928, %v923, 0
    %v966 = vsel %vm928, %v924, 0
    %v969 = vsel %vm928, %v925, 0
    %v972 = vsel %vm928, %v926, 0
    %v975 = vsel %vm928, %v927, 0
    %977 = vmatpush.bf16.msra.mxu0 0
    %978 = vmatpush.bf16.msra.mxu0 0
    %979 = vmatpush.bf16.msra.mxu0 0
    %980 = vmatpush.bf16.msra.mxu0 0
    %981 = vmatpush.bf16.msra.mxu0 0
    %982 = vmatpush.bf16.msra.mxu0 %v620
    %983 = vmatpush.bf16.msra.mxu0 %v616
    %984 = vmatpush.bf16.msra.mxu0 %v612
    %985 = vmatmul.bf16.gmra.mxu0 %v930
    %v986 = vpop.f32.mrf.mxu0
    %v987 = vadd.f32 %v691, %v986
    %v988 = vpop.f32.mrf.mxu0
    %v989 = vadd.f32 %v696, %v988
    %990 = vmatmul.bf16.gmra.mxu0 %v933
    %v991 = vpop.f32.mrf.mxu0
    %v992 = vadd.f32 %v701, %v991
    %v993 = vpop.f32.mrf.mxu0
    %v994 = vadd.f32 %v706, %v993
    %995 = vmatmul.bf16.gmra.mxu0 %v936
    %v996 = vpop.f32.mrf.mxu0
    %v997 = vadd.f32 %v711, %v996
    %v998 = vpop.f32.mrf.mxu0
    %v999 = vadd.f32 %v716, %v998
    %1000 = vmatmul.bf16.gmra.mxu0 %v939
    %v1001 = vpop.f32.mrf.mxu0
    %v1002 = vadd.f32 %v721, %v1001
    %v1003 = vpop.f32.mrf.mxu0
    %v1004 = vadd.f32 %v726, %v1003
    %1005 = vmatmul.bf16.gmra.mxu0 %v942
    %v1006 = vpop.f32.mrf.mxu0
    %v1007 = vadd.f32 %v731, %v1006
    %v1008 = vpop.f32.mrf.mxu0
    %v1009 = vadd.f32 %v736, %v1008
    %1010 = vmatmul.bf16.gmra.mxu0 %v945
    %v1011 = vpop.f32.mrf.mxu0
    %v1012 = vadd.f32 %v741, %v1011
    %v1013 = vpop.f32.mrf.mxu0
    %v1014 = vadd.f32 %v746, %v1013
    %1015 = vmatmul.bf16.gmra.mxu0 %v948
    %v1016 = vpop.f32.mrf.mxu0
    %v1017 = vadd.f32 %v751, %v1016
    %v1018 = vpop.f32.mrf.mxu0
    %v1019 = vadd.f32 %v756, %v1018
    %1020 = vmatmul.bf16.gmra.mxu0 %v951
    %v1021 = vpop.f32.mrf.mxu0
    %v1022 = vadd.f32 %v761, %v1021
    %v1023 = vpop.f32.mrf.mxu0
    %v1024 = vadd.f32 %v766, %v1023
    %1025 = vmatmul.bf16.gmra.mxu0 %v954
    %v1026 = vpop.f32.mrf.mxu0
    %v1027 = vadd.f32 %v771, %v1026
    %v1028 = vpop.f32.mrf.mxu0
    %v1029 = vadd.f32 %v776, %v1028
    %1030 = vmatmul.bf16.gmra.mxu0 %v957
    %v1031 = vpop.f32.mrf.mxu0
    %v1032 = vadd.f32 %v781, %v1031
    %v1033 = vpop.f32.mrf.mxu0
    %v1034 = vadd.f32 %v786, %v1033
    %1035 = vmatmul.bf16.gmra.mxu0 %v960
    %v1036 = vpop.f32.mrf.mxu0
    %v1037 = vadd.f32 %v791, %v1036
    %v1038 = vpop.f32.mrf.mxu0
    %v1039 = vadd.f32 %v796, %v1038
    %1040 = vmatmul.bf16.gmra.mxu0 %v963
    %v1041 = vpop.f32.mrf.mxu0
    %v1042 = vadd.f32 %v801, %v1041
    %v1043 = vpop.f32.mrf.mxu0
    %v1044 = vadd.f32 %v806, %v1043
    %1045 = vmatmul.bf16.gmra.mxu0 %v966
    %v1046 = vpop.f32.mrf.mxu0
    %v1047 = vadd.f32 %v811, %v1046
    %v1048 = vpop.f32.mrf.mxu0
    %v1049 = vadd.f32 %v816, %v1048
    %1050 = vmatmul.bf16.gmra.mxu0 %v969
    %v1051 = vpop.f32.mrf.mxu0
    %v1052 = vadd.f32 %v821, %v1051
    %v1053 = vpop.f32.mrf.mxu0
    %v1054 = vadd.f32 %v826, %v1053
    %1055 = vmatmul.bf16.gmra.mxu0 %v972
    %v1056 = vpop.f32.mrf.mxu0
    %v1057 = vadd.f32 %v831, %v1056
    %v1058 = vpop.f32.mrf.mxu0
    %v1059 = vadd.f32 %v836, %v1058
    %1060 = vmatmul.bf16.gmra.mxu0 %v975
    %v1061 = vpop.f32.mrf.mxu0
    %v1062 = vadd.f32 %v841, %v1061
    %v1063 = vpop.f32.mrf.mxu0
    %v1064 = vadd.f32 %v846, %v1063
    %1065 = vdwg.mxu0
    %1066 = vmatpush.bf16.msra.mxu0 0
    %1067 = vmatpush.bf16.msra.mxu0 0
    %1068 = vmatpush.bf16.msra.mxu0 0
    %1069 = vmatpush.bf16.msra.mxu0 0
    %1070 = vmatpush.bf16.msra.mxu0 0
    %1071 = vmatpush.bf16.msra.mxu0 %v621
    %1072 = vmatpush.bf16.msra.mxu0 %v617
    %1073 = vmatpush.bf16.msra.mxu0 %v613
    %1074 = vmatmul.bf16.gmra.mxu0 %v930
    %v1075 = vpop.f32.mrf.mxu0
    %v1076 = vadd.f32 %v691, %v1075
    %v1077 = vpop.f32.mrf.mxu0
    %v1078 = vadd.f32 %v696, %v1077
    %1079 = vmatmul.bf16.gmra.mxu0 %v933
    %v1080 = vpop.f32.mrf.mxu0
    %v1081 = vadd.f32 %v701, %v1080
    %v1082 = vpop.f32.mrf.mxu0
    %v1083 = vadd.f32 %v706, %v1082
    %1084 = vmatmul.bf16.gmra.mxu0 %v936
    %v1085 = vpop.f32.mrf.mxu0
    %v1086 = vadd.f32 %v711, %v1085
    %v1087 = vpop.f32.mrf.mxu0
    %v1088 = vadd.f32 %v716, %v1087
    %1089 = vmatmul.bf16.gmra.mxu0 %v939
    %v1090 = vpop.f32.mrf.mxu0
    %v1091 = vadd.f32 %v721, %v1090
    %v1092 = vpop.f32.mrf.mxu0
    %v1093 = vadd.f32 %v726, %v1092
    %1094 = vmatmul.bf16.gmra.mxu0 %v942
    %v1095 = vpop.f32.mrf.mxu0
    %v1096 = vadd.f32 %v731, %v1095
    %v1097 = vpop.f32.mrf.mxu0
    %v1098 = vadd.f32 %v736, %v1097
    %1099 = vmatmul.bf16.gmra.mxu0 %v945
    %v1100 = vpop.f32.mrf.mxu0
    %v1101 = vadd.f32 %v741, %v1100
    %v1102 = vpop.f32.mrf.mxu0
    %v1103 = vadd.f32 %v746, %v1102
    %1104 = vmatmul.bf16.gmra.mxu0 %v948
    %v1105 = vpop.f32.mrf.mxu0
    %v1106 = vadd.f32 %v751, %v1105
    %v1107 = vpop.f32.mrf.mxu0
    %v1108 = vadd.f32 %v756, %v1107
    %1109 = vmatmul.bf16.gmra.mxu0 %v951
    %v1110 = vpop.f32.mrf.mxu0
    %v1111 = vadd.f32 %v761, %v1110
    %v1112 = vpop.f32.mrf.mxu0
    %v1113 = vadd.f32 %v766, %v1112
    %1114 = vmatmul.bf16.gmra.mxu0 %v954
    %v1115 = vpop.f32.mrf.mxu0
    %v1116 = vadd.f32 %v771, %v1115
    %v1117 = vpop.f32.mrf.mxu0
    %v1118 = vadd.f32 %v776, %v1117
    %1119 = vmatmul.bf16.gmra.mxu0 %v957
    %v1120 = vpop.f32.mrf.mxu0
    %v1121 = vadd.f32 %v781, %v1120
    %v1122 = vpop.f32.mrf.mxu0
    %v1123 = vadd.f32 %v786, %v1122
    %1124 = vmatmul.bf16.gmra.mxu0 %v960
    %v1125 = vpop.f32.mrf.mxu0
    %v1126 = vadd.f32 %v791, %v1125
    %v1127 = vpop.f32.mrf.mxu0
    %v1128 = vadd.f32 %v796, %v1127
    %1129 = vmatmul.bf16.gmra.mxu0 %v963
    %v1130 = vpop.f32.mrf.mxu0
    %v1131 = vadd.f32 %v801, %v1130
    %v1132 = vpop.f32.mrf.mxu0
    %v1133 = vadd.f32 %v806, %v1132
    %1134 = vmatmul.bf16.gmra.mxu0 %v966
    %v1135 = vpop.f32.mrf.mxu0
    %v1136 = vadd.f32 %v811, %v1135
    %v1137 = vpop.f32.mrf.mxu0
    %v1138 = vadd.f32 %v816, %v1137
    %1139 = vmatmul.bf16.gmra.mxu0 %v969
    %v1140 = vpop.f32.mrf.mxu0
    %v1141 = vadd.f32 %v821, %v1140
    %v1142 = vpop.f32.mrf.mxu0
    %v1143 = vadd.f32 %v826, %v1142
    %1144 = vmatmul.bf16.gmra.mxu0 %v972
    %v1145 = vpop.f32.mrf.mxu0
    %v1146 = vadd.f32 %v831, %v1145
    %v1147 = vpop.f32.mrf.mxu0
    %v1148 = vadd.f32 %v836, %v1147
    %1149 = vmatmul.bf16.gmra.mxu0 %v975
    %v1150 = vpop.f32.mrf.mxu0
    %v1151 = vadd.f32 %v841, %v1150
    %v1152 = vpop.f32.mrf.mxu0
    %v1153 = vadd.f32 %v846, %v1152
    %1154 = vdwg.mxu0
    %1155 = vmatpush.bf16.msra.mxu0 0
    %1156 = vmatpush.bf16.msra.mxu0 0
    %1157 = vmatpush.bf16.msra.mxu0 0
    %1158 = vmatpush.bf16.msra.mxu0 0
    %1159 = vmatpush.bf16.msra.mxu0 0
    %1160 = vmatpush.bf16.msra.mxu0 %v622
    %1161 = vmatpush.bf16.msra.mxu0 %v618
    %1162 = vmatpush.bf16.msra.mxu0 %v614
    %1163 = vmatmul.bf16.gmra.mxu0 %v930
    %v1164 = vpop.f32.mrf.mxu0
    %v1165 = vadd.f32 %v691, %v1164
    %v1166 = vpop.f32.mrf.mxu0
    %v1167 = vadd.f32 %v696, %v1166
    %1168 = vmatmul.bf16.gmra.mxu0 %v933
    %v1169 = vpop.f32.mrf.mxu0
    %v1170 = vadd.f32 %v701, %v1169
    %v1171 = vpop.f32.mrf.mxu0
    %v1172 = vadd.f32 %v706, %v1171
    %1173 = vmatmul.bf16.gmra.mxu0 %v936
    %v1174 = vpop.f32.mrf.mxu0
    %v1175 = vadd.f32 %v711, %v1174
    %v1176 = vpop.f32.mrf.mxu0
    %v1177 = vadd.f32 %v716, %v1176
    %1178 = vmatmul.bf16.gmra.mxu0 %v939
    %v1179 = vpop.f32.mrf.mxu0
    %v1180 = vadd.f32 %v721, %v1179
    %v1181 = vpop.f32.mrf.mxu0
    %v1182 = vadd.f32 %v726, %v1181
    %1183 = vmatmul.bf16.gmra.mxu0 %v942
    %v1184 = vpop.f32.mrf.mxu0
    %v1185 = vadd.f32 %v731, %v1184
    %v1186 = vpop.f32.mrf.mxu0
    %v1187 = vadd.f32 %v736, %v1186
    %1188 = vmatmul.bf16.gmra.mxu0 %v945
    %v1189 = vpop.f32.mrf.mxu0
    %v1190 = vadd.f32 %v741, %v1189
    %v1191 = vpop.f32.mrf.mxu0
    %v1192 = vadd.f32 %v746, %v1191
    %1193 = vmatmul.bf16.gmra.mxu0 %v948
    %v1194 = vpop.f32.mrf.mxu0
    %v1195 = vadd.f32 %v751, %v1194
    %v1196 = vpop.f32.mrf.mxu0
    %v1197 = vadd.f32 %v756, %v1196
    %1198 = vmatmul.bf16.gmra.mxu0 %v951
    %v1199 = vpop.f32.mrf.mxu0
    %v1200 = vadd.f32 %v761, %v1199
    %v1201 = vpop.f32.mrf.mxu0
    %v1202 = vadd.f32 %v766, %v1201
    %1203 = vmatmul.bf16.gmra.mxu0 %v954
    %v1204 = vpop.f32.mrf.mxu0
    %v1205 = vadd.f32 %v771, %v1204
    %v1206 = vpop.f32.mrf.mxu0
    %v1207 = vadd.f32 %v776, %v1206
    %1208 = vmatmul.bf16.gmra.mxu0 %v957
    %v1209 = vpop.f32.mrf.mxu0
    %v1210 = vadd.f32 %v781, %v1209
    %v1211 = vpop.f32.mrf.mxu0
    %v1212 = vadd.f32 %v786, %v1211
    %1213 = vmatmul.bf16.gmra.mxu0 %v960
    %v1214 = vpop.f32.mrf.mxu0
    %v1215 = vadd.f32 %v791, %v1214
    %v1216 = vpop.f32.mrf.mxu0
    %v1217 = vadd.f32 %v796, %v1216
    %1218 = vmatmul.bf16.gmra.mxu0 %v963
    %v1219 = vpop.f32.mrf.mxu0
    %v1220 = vadd.f32 %v801, %v1219
    %v1221 = vpop.f32.mrf.mxu0
    %v1222 = vadd.f32 %v806, %v1221
    %1223 = vmatmul.bf16.gmra.mxu0 %v966
    %v1224 = vpop.f32.mrf.mxu0
    %v1225 = vadd.f32 %v811, %v1224
    %v1226 = vpop.f32.mrf.mxu0
    %v1227 = vadd.f32 %v816, %v1226
    %1228 = vmatmul.bf16.gmra.mxu0 %v969
    %v1229 = vpop.f32.mrf.mxu0
    %v1230 = vadd.f32 %v821, %v1229
    %v1231 = vpop.f32.mrf.mxu0
    %v1232 = vadd.f32 %v826, %v1231
    %1233 = vmatmul.bf16.gmra.mxu0 %v972
    %v1234 = vpop.f32.mrf.mxu0
    %v1235 = vadd.f32 %v831, %v1234
    %v1236 = vpop.f32.mrf.mxu0
    %v1237 = vadd.f32 %v836, %v1236
    %1238 = vmatmul.bf16.gmra.mxu0 %v975
    %v1239 = vpop.f32.mrf.mxu0
    %v1240 = vadd.f32 %v841, %v1239
    %v1241 = vpop.f32.mrf.mxu0
    %v1242 = vadd.f32 %v846, %v1241
    %1243 = vdwg.mxu0
    %1244 = vmatpush.bf16.msra.mxu0 0
    %1245 = vmatpush.bf16.msra.mxu0 0
    %1246 = vmatpush.bf16.msra.mxu0 0
    %1247 = vmatpush.bf16.msra.mxu0 0
    %1248 = vmatpush.bf16.msra.mxu0 0
    %1249 = vmatpush.bf16.msra.mxu0 %v623
    %1250 = vmatpush.bf16.msra.mxu0 %v619
    %1251 = vmatpush.bf16.msra.mxu0 %v615
    %1252 = vmatmul.bf16.gmra.mxu0 %v930
    %v1253 = vpop.f32.mrf.mxu0
    %v1254 = vadd.f32 %v691, %v1253
    %v1255 = vpop.f32.mrf.mxu0
    %v1256 = vadd.f32 %v696, %v1255
    %1257 = vmatmul.bf16.gmra.mxu0 %v933
    %v1258 = vpop.f32.mrf.mxu0
    %v1259 = vadd.f32 %v701, %v1258
    %v1260 = vpop.f32.mrf.mxu0
    %v1261 = vadd.f32 %v706, %v1260
    %1262 = vmatmul.bf16.gmra.mxu0 %v936
    %v1263 = vpop.f32.mrf.mxu0
    %v1264 = vadd.f32 %v711, %v1263
    %v1265 = vpop.f32.mrf.mxu0
    %v1266 = vadd.f32 %v716, %v1265
    %1267 = vmatmul.bf16.gmra.mxu0 %v939
    %v1268 = vpop.f32.mrf.mxu0
    %v1269 = vadd.f32 %v721, %v1268
    %v1270 = vpop.f32.mrf.mxu0
    %v1271 = vadd.f32 %v726, %v1270
    %1272 = vmatmul.bf16.gmra.mxu0 %v942
    %v1273 = vpop.f32.mrf.mxu0
    %v1274 = vadd.f32 %v731, %v1273
    %v1275 = vpop.f32.mrf.mxu0
    %v1276 = vadd.f32 %v736, %v1275
    %1277 = vmatmul.bf16.gmra.mxu0 %v945
    %v1278 = vpop.f32.mrf.mxu0
    %v1279 = vadd.f32 %v741, %v1278
    %v1280 = vpop.f32.mrf.mxu0
    %v1281 = vadd.f32 %v746, %v1280
    %1282 = vmatmul.bf16.gmra.mxu0 %v948
    %v1283 = vpop.f32.mrf.mxu0
    %v1284 = vadd.f32 %v751, %v1283
    %v1285 = vpop.f32.mrf.mxu0
    %v1286 = vadd.f32 %v756, %v1285
    %1287 = vmatmul.bf16.gmra.mxu0 %v951
    %v1288 = vpop.f32.mrf.mxu0
    %v1289 = vadd.f32 %v761, %v1288
    %v1290 = vpop.f32.mrf.mxu0
    %v1291 = vadd.f32 %v766, %v1290
    %1292 = vmatmul.bf16.gmra.mxu0 %v954
    %v1293 = vpop.f32.mrf.mxu0
    %v1294 = vadd.f32 %v771, %v1293
    %v1295 = vpop.f32.mrf.mxu0
    %v1296 = vadd.f32 %v776, %v1295
    %1297 = vmatmul.bf16.gmra.mxu0 %v957
    %v1298 = vpop.f32.mrf.mxu0
    %v1299 = vadd.f32 %v781, %v1298
    %v1300 = vpop.f32.mrf.mxu0
    %v1301 = vadd.f32 %v786, %v1300
    %1302 = vmatmul.bf16.gmra.mxu0 %v960
    %v1303 = vpop.f32.mrf.mxu0
    %v1304 = vadd.f32 %v791, %v1303
    %v1305 = vpop.f32.mrf.mxu0
    %v1306 = vadd.f32 %v796, %v1305
    %1307 = vmatmul.bf16.gmra.mxu0 %v963
    %v1308 = vpop.f32.mrf.mxu0
    %v1309 = vadd.f32 %v801, %v1308
    %v1310 = vpop.f32.mrf.mxu0
    %v1311 = vadd.f32 %v806, %v1310
    %1312 = vmatmul.bf16.gmra.mxu0 %v966
    %v1313 = vpop.f32.mrf.mxu0
    %v1314 = vadd.f32 %v811, %v1313
    %v1315 = vpop.f32.mrf.mxu0
    %v1316 = vadd.f32 %v816, %v1315
    %1317 = vmatmul.bf16.gmra.mxu0 %v969
    %v1318 = vpop.f32.mrf.mxu0
    %v1319 = vadd.f32 %v821, %v1318
    %v1320 = vpop.f32.mrf.mxu0
    %v1321 = vadd.f32 %v826, %v1320
    %1322 = vmatmul.bf16.gmra.mxu0 %v972
    %v1323 = vpop.f32.mrf.mxu0
    %v1324 = vadd.f32 %v831, %v1323
    %v1325 = vpop.f32.mrf.mxu0
    %v1326 = vadd.f32 %v836, %v1325
    %1327 = vmatmul.bf16.gmra.mxu0 %v975
    %v1328 = vpop.f32.mrf.mxu0
    %v1329 = vadd.f32 %v841, %v1328
    %v1330 = vpop.f32.mrf.mxu0
    %v1331 = vadd.f32 %v846, %v1330
    %1332 = vdwg.mxu0
    %v1333 = vmax.f32 %v987, 0.0
    %v1334 = vmax.f32 %v1076, 0.0
    %v1335 = vmax.f32 %v1165, 0.0
    %v1336 = vmax.f32 %v1254, 0.0
    %v1337 = vmax.f32 %v989, 0.0
    %v1338 = vmax.f32 %v1078, 0.0
    %v1339 = vmax.f32 %v1167, 0.0
    %v1340 = vmax.f32 %v1256, 0.0
    %v1341 = vmax.f32 %v992, 0.0
    %v1342 = vmax.f32 %v1081, 0.0
    %v1343 = vmax.f32 %v1170, 0.0
    %v1344 = vmax.f32 %v1259, 0.0
    %v1345 = vmax.f32 %v994, 0.0
    %v1346 = vmax.f32 %v1083, 0.0
    %v1347 = vmax.f32 %v1172, 0.0
    %v1348 = vmax.f32 %v1261, 0.0
    %v1349 = vmax.f32 %v997, 0.0
    %v1350 = vmax.f32 %v1086, 0.0
    %v1351 = vmax.f32 %v1175, 0.0
    %v1352 = vmax.f32 %v1264, 0.0
    %v1353 = vmax.f32 %v999, 0.0
    %v1354 = vmax.f32 %v1088, 0.0
    %v1355 = vmax.f32 %v1177, 0.0
    %v1356 = vmax.f32 %v1266, 0.0
    %v1357 = vmax.f32 %v1002, 0.0
    %v1358 = vmax.f32 %v1091, 0.0
    %v1359 = vmax.f32 %v1180, 0.0
    %v1360 = vmax.f32 %v1269, 0.0
    %v1361 = vmax.f32 %v1004, 0.0
    %v1362 = vmax.f32 %v1093, 0.0
    %v1363 = vmax.f32 %v1182, 0.0
    %v1364 = vmax.f32 %v1271, 0.0
    %v1365 = vmax.f32 %v1007, 0.0
    %v1366 = vmax.f32 %v1096, 0.0
    %v1367 = vmax.f32 %v1185, 0.0
    %v1368 = vmax.f32 %v1274, 0.0
    %v1369 = vmax.f32 %v1009, 0.0
    %v1370 = vmax.f32 %v1098, 0.0
    %v1371 = vmax.f32 %v1187, 0.0
    %v1372 = vmax.f32 %v1276, 0.0
    %v1373 = vmax.f32 %v1012, 0.0
    %v1374 = vmax.f32 %v1101, 0.0
    %v1375 = vmax.f32 %v1190, 0.0
    %v1376 = vmax.f32 %v1279, 0.0
    %v1377 = vmax.f32 %v1014, 0.0
    %v1378 = vmax.f32 %v1103, 0.0
    %v1379 = vmax.f32 %v1192, 0.0
    %v1380 = vmax.f32 %v1281, 0.0
    %v1381 = vmax.f32 %v1017, 0.0
    %v1382 = vmax.f32 %v1106, 0.0
    %v1383 = vmax.f32 %v1195, 0.0
    %v1384 = vmax.f32 %v1284, 0.0
    %v1385 = vmax.f32 %v1019, 0.0
    %v1386 = vmax.f32 %v1108, 0.0
    %v1387 = vmax.f32 %v1197, 0.0
    %v1388 = vmax.f32 %v1286, 0.0
    %v1389 = vmax.f32 %v1022, 0.0
    %v1390 = vmax.f32 %v1111, 0.0
    %v1391 = vmax.f32 %v1200, 0.0
    %v1392 = vmax.f32 %v1289, 0.0
    %v1393 = vmax.f32 %v1024, 0.0
    %v1394 = vmax.f32 %v1113, 0.0
    %v1395 = vmax.f32 %v1202, 0.0
    %v1396 = vmax.f32 %v1291, 0.0
    %v1397 = vmax.f32 %v1027, 0.0
    %v1398 = vmax.f32 %v1116, 0.0
    %v1399 = vmax.f32 %v1205, 0.0
    %v1400 = vmax.f32 %v1294, 0.0
    %v1401 = vmax.f32 %v1029, 0.0
    %v1402 = vmax.f32 %v1118, 0.0
    %v1403 = vmax.f32 %v1207, 0.0
    %v1404 = vmax.f32 %v1296, 0.0
    %v1405 = vmax.f32 %v1032, 0.0
    %v1406 = vmax.f32 %v1121, 0.0
    %v1407 = vmax.f32 %v1210, 0.0
    %v1408 = vmax.f32 %v1299, 0.0
    %v1409 = vmax.f32 %v1034, 0.0
    %v1410 = vmax.f32 %v1123, 0.0
    %v1411 = vmax.f32 %v1212, 0.0
    %v1412 = vmax.f32 %v1301, 0.0
    %v1413 = vmax.f32 %v1037, 0.0
    %v1414 = vmax.f32 %v1126, 0.0
    %v1415 = vmax.f32 %v1215, 0.0
    %v1416 = vmax.f32 %v1304, 0.0
    %v1417 = vmax.f32 %v1039, 0.0
    %v1418 = vmax.f32 %v1128, 0.0
    %v1419 = vmax.f32 %v1217, 0.0
    %v1420 = vmax.f32 %v1306, 0.0
    %v1421 = vmax.f32 %v1042, 0.0
    %v1422 = vmax.f32 %v1131, 0.0
    %v1423 = vmax.f32 %v1220, 0.0
    %v1424 = vmax.f32 %v1309, 0.0
    %v1425 = vmax.f32 %v1044, 0.0
    %v1426 = vmax.f32 %v1133, 0.0
    %v1427 = vmax.f32 %v1222, 0.0
    %v1428 = vmax.f32 %v1311, 0.0
    %v1429 = vmax.f32 %v1047, 0.0
    %v1430 = vmax.f32 %v1136, 0.0
    %v1431 = vmax.f32 %v1225, 0.0
    %v1432 = vmax.f32 %v1314, 0.0
    %v1433 = vmax.f32 %v1049, 0.0
    %v1434 = vmax.f32 %v1138, 0.0
    %v1435 = vmax.f32 %v1227, 0.0
    %v1436 = vmax.f32 %v1316, 0.0
    %v1437 = vmax.f32 %v1052, 0.0
    %v1438 = vmax.f32 %v1141, 0.0
    %v1439 = vmax.f32 %v1230, 0.0
    %v1440 = vmax.f32 %v1319, 0.0
    %v1441 = vmax.f32 %v1054, 0.0
    %v1442 = vmax.f32 %v1143, 0.0
    %v1443 = vmax.f32 %v1232, 0.0
    %v1444 = vmax.f32 %v1321, 0.0
    %v1445 = vmax.f32 %v1057, 0.0
    %v1446 = vmax.f32 %v1146, 0.0
    %v1447 = vmax.f32 %v1235, 0.0
    %v1448 = vmax.f32 %v1324, 0.0
    %v1449 = vmax.f32 %v1059, 0.0
    %v1450 = vmax.f32 %v1148, 0.0
    %v1451 = vmax.f32 %v1237, 0.0
    %v1452 = vmax.f32 %v1326, 0.0
    %v1453 = vmax.f32 %v1062, 0.0
    %v1454 = vmax.f32 %v1151, 0.0
    %v1455 = vmax.f32 %v1240, 0.0
    %v1456 = vmax.f32 %v1329, 0.0
    %v1457 = vmax.f32 %v1064, 0.0
    %v1458 = vmax.f32 %v1153, 0.0
    %v1459 = vmax.f32 %v1242, 0.0
    %v1460 = vmax.f32 %v1331, 0.0
    %v1461 = vpack.c.bf16 %v1337, %v1333
    %v1462 = vpack.c.bf16 %v1338, %v1334
    %v1463 = vpack.c.bf16 %v1339, %v1335
    %v1464 = vpack.c.bf16 %v1340, %v1336
    %v1465 = vpack.c.bf16 %v1345, %v1341
    %v1466 = vpack.c.bf16 %v1346, %v1342
    %v1467 = vpack.c.bf16 %v1347, %v1343
    %v1468 = vpack.c.bf16 %v1348, %v1344
    %v1469 = vpack.c.bf16 %v1353, %v1349
    %v1470 = vpack.c.bf16 %v1354, %v1350
    %v1471 = vpack.c.bf16 %v1355, %v1351
    %v1472 = vpack.c.bf16 %v1356, %v1352
    %v1473 = vpack.c.bf16 %v1361, %v1357
    %v1474 = vpack.c.bf16 %v1362, %v1358
    %v1475 = vpack.c.bf16 %v1363, %v1359
    %v1476 = vpack.c.bf16 %v1364, %v1360
    %v1477 = vpack.c.bf16 %v1369, %v1365
    %v1478 = vpack.c.bf16 %v1370, %v1366
    %v1479 = vpack.c.bf16 %v1371, %v1367
    %v1480 = vpack.c.bf16 %v1372, %v1368
    %v1481 = vpack.c.bf16 %v1377, %v1373
    %v1482 = vpack.c.bf16 %v1378, %v1374
    %v1483 = vpack.c.bf16 %v1379, %v1375
    %v1484 = vpack.c.bf16 %v1380, %v1376
    %v1485 = vpack.c.bf16 %v1385, %v1381
    %v1486 = vpack.c.bf16 %v1386, %v1382
    %v1487 = vpack.c.bf16 %v1387, %v1383
    %v1488 = vpack.c.bf16 %v1388, %v1384
    %v1489 = vpack.c.bf16 %v1393, %v1389
    %v1490 = vpack.c.bf16 %v1394, %v1390
    %v1491 = vpack.c.bf16 %v1395, %v1391
    %v1492 = vpack.c.bf16 %v1396, %v1392
    %v1493 = vpack.c.bf16 %v1401, %v1397
    %v1494 = vpack.c.bf16 %v1402, %v1398
    %v1495 = vpack.c.bf16 %v1403, %v1399
    %v1496 = vpack.c.bf16 %v1404, %v1400
    %v1497 = vpack.c.bf16 %v1409, %v1405
    %v1498 = vpack.c.bf16 %v1410, %v1406
    %v1499 = vpack.c.bf16 %v1411, %v1407
    %v1500 = vpack.c.bf16 %v1412, %v1408
    %v1501 = vpack.c.bf16 %v1417, %v1413
    %v1502 = vpack.c.bf16 %v1418, %v1414
    %v1503 = vpack.c.bf16 %v1419, %v1415
    %v1504 = vpack.c.bf16 %v1420, %v1416
    %v1505 = vpack.c.bf16 %v1425, %v1421
    %v1506 = vpack.c.bf16 %v1426, %v1422
    %v1507 = vpack.c.bf16 %v1427, %v1423
    %v1508 = vpack.c.bf16 %v1428, %v1424
    %v1509 = vpack.c.bf16 %v1433, %v1429
    %v1510 = vpack.c.bf16 %v1434, %v1430
    %v1511 = vpack.c.bf16 %v1435, %v1431
    %v1512 = vpack.c.bf16 %v1436, %v1432
    %v1513 = vpack.c.bf16 %v1441, %v1437
    %v1514 = vpack.c.bf16 %v1442, %v1438
    %v1515 = vpack.c.bf16 %v1443, %v1439
    %v1516 = vpack.c.bf16 %v1444, %v1440
    %v1517 = vpack.c.bf16 %v1449, %v1445
    %v1518 = vpack.c.bf16 %v1450, %v1446
    %v1519 = vpack.c.bf16 %v1451, %v1447
    %v1520 = vpack.c.bf16 %v1452, %v1448
    %v1521 = vpack.c.bf16 %v1457, %v1453
    %v1522 = vpack.c.bf16 %v1458, %v1454
    %v1523 = vpack.c.bf16 %v1459, %v1455
    %v1524 = vpack.c.bf16 %v1460, %v1456
    %v1525 = vld [vmem:[%s4] sm:$0xff]
    %v1526 = vld [vmem:[%s4 + $0x8] sm:$0xff]
    %v1527 = vld [vmem:[%s4 + $0x10] sm:$0xff]
    %v1528 = vld [vmem:[%s4 + $0x18] sm:$0xff]
    %v1529 = vld [vmem:[%s4 + $0x20] sm:$0xff]
    %v1530 = vld [vmem:[%s4 + $0x28] sm:$0xff]
    %v1531 = vld [vmem:[%s4 + $0x30] sm:$0xff]
    %v1532 = vld [vmem:[%s4 + $0x38] sm:$0xff]
    %v1533 = vld [vmem:[%s4 + $0x40] sm:$0xff]
    %v1534 = vld [vmem:[%s4 + $0x48] sm:$0xff]
    %v1535 = vld [vmem:[%s4 + $0x50] sm:$0xff]
    %v1536 = vld [vmem:[%s4 + $0x58] sm:$0xff]
    %v1537 = vld [vmem:[%s4 + $0x60] sm:$0xff]
    %v1538 = vld [vmem:[%s4 + $0x68] sm:$0xff]
    %v1539 = vld [vmem:[%s4 + $0x70] sm:$0xff]
    %v1540 = vld [vmem:[%s4 + $0x78] sm:$0xff]
    %v1541 = vld [vmem:[%s5] sm:$0xff]
    %v1542 = vld [vmem:[%s5 + $0x8] sm:$0xff]
    %v1543 = vld [vmem:[%s5 + $0x10] sm:$0xff]
    %v1544 = vld [vmem:[%s5 + $0x18] sm:$0xff]
    %v1545 = vld [vmem:[%s5 + $0x20] sm:$0xff]
    %v1546 = vld [vmem:[%s5 + $0x28] sm:$0xff]
    %v1547 = vld [vmem:[%s5 + $0x30] sm:$0xff]
    %v1548 = vld [vmem:[%s5 + $0x38] sm:$0xff]
    %v1549 = vld [vmem:[%s5 + $0x40] sm:$0xff]
    %v1550 = vld [vmem:[%s5 + $0x48] sm:$0xff]
    %v1551 = vld [vmem:[%s5 + $0x50] sm:$0xff]
    %v1552 = vld [vmem:[%s5 + $0x58] sm:$0xff]
    %v1553 = vld [vmem:[%s5 + $0x60] sm:$0xff]
    %v1554 = vld [vmem:[%s5 + $0x68] sm:$0xff]
    %v1555 = vld [vmem:[%s5 + $0x70] sm:$0xff]
    %v1556 = vld [vmem:[%s5 + $0x78] sm:$0xff]
    %1558 = vset.pattern.permute.xlu0 0
    %1559 = vperm.xlu0 %1558, %v1541
    %v1560 = vpop.permute.xlu0 %1559
    %1563 = vset.pattern.permute.xlu0 0
    %1564 = vperm.xlu0 %1563, %v1542
    %v1565 = vpop.permute.xlu0 %1564
    %1568 = vset.pattern.permute.xlu0 0
    %1569 = vperm.xlu0 %1568, %v1543
    %v1570 = vpop.permute.xlu0 %1569
    %1573 = vset.pattern.permute.xlu0 0
    %1574 = vperm.xlu0 %1573, %v1544
    %v1575 = vpop.permute.xlu0 %1574
    %1578 = vset.pattern.permute.xlu0 0
    %1579 = vperm.xlu0 %1578, %v1545
    %v1580 = vpop.permute.xlu0 %1579
    %1583 = vset.pattern.permute.xlu0 0
    %1584 = vperm.xlu0 %1583, %v1546
    %v1585 = vpop.permute.xlu0 %1584
    %1588 = vset.pattern.permute.xlu0 0
    %1589 = vperm.xlu0 %1588, %v1547
    %v1590 = vpop.permute.xlu0 %1589
    %1593 = vset.pattern.permute.xlu0 0
    %1594 = vperm.xlu0 %1593, %v1548
    %v1595 = vpop.permute.xlu0 %1594
    %1598 = vset.pattern.permute.xlu0 0
    %1599 = vperm.xlu0 %1598, %v1549
    %v1600 = vpop.permute.xlu0 %1599
    %1603 = vset.pattern.permute.xlu0 0
    %1604 = vperm.xlu0 %1603, %v1550
    %v1605 = vpop.permute.xlu0 %1604
    %1608 = vset.pattern.permute.xlu0 0
    %1609 = vperm.xlu0 %1608, %v1551
    %v1610 = vpop.permute.xlu0 %1609
    %1613 = vset.pattern.permute.xlu0 0
    %1614 = vperm.xlu0 %1613, %v1552
    %v1615 = vpop.permute.xlu0 %1614
    %1618 = vset.pattern.permute.xlu0 0
    %1619 = vperm.xlu0 %1618, %v1553
    %v1620 = vpop.permute.xlu0 %1619
    %1623 = vset.pattern.permute.xlu0 0
    %1624 = vperm.xlu0 %1623, %v1554
    %v1625 = vpop.permute.xlu0 %1624
    %1628 = vset.pattern.permute.xlu0 0
    %1629 = vperm.xlu0 %1628, %v1555
    %v1630 = vpop.permute.xlu0 %1629
    %1633 = vset.pattern.permute.xlu0 0
    %1634 = vperm.xlu0 %1633, %v1556
    %v1635 = vpop.permute.xlu0 %1634
    %v1653 = vunpack.c.l.b16 %v1525
    %v1654 = vunpack.c.h.b16 %v1525
    %v1655 = vunpack.c.l.b16 %v1526
    %v1656 = vunpack.c.h.b16 %v1526
    %v1657 = vunpack.c.l.b16 %v1527
    %v1658 = vunpack.c.h.b16 %v1527
    %v1659 = vunpack.c.l.b16 %v1528
    %v1660 = vunpack.c.h.b16 %v1528
    %v1661 = vunpack.c.l.b16 %v1529
    %v1662 = vunpack.c.h.b16 %v1529
    %v1663 = vunpack.c.l.b16 %v1530
    %v1664 = vunpack.c.h.b16 %v1530
    %v1665 = vunpack.c.l.b16 %v1531
    %v1666 = vunpack.c.h.b16 %v1531
    %v1667 = vunpack.c.l.b16 %v1532
    %v1668 = vunpack.c.h.b16 %v1532
    %v1669 = vunpack.c.l.b16 %v1533
    %v1670 = vunpack.c.h.b16 %v1533
    %v1671 = vunpack.c.l.b16 %v1534
    %v1672 = vunpack.c.h.b16 %v1534
    %v1673 = vunpack.c.l.b16 %v1535
    %v1674 = vunpack.c.h.b16 %v1535
    %v1675 = vunpack.c.l.b16 %v1536
    %v1676 = vunpack.c.h.b16 %v1536
    %v1677 = vunpack.c.l.b16 %v1537
    %v1678 = vunpack.c.h.b16 %v1537
    %v1679 = vunpack.c.l.b16 %v1538
    %v1680 = vunpack.c.h.b16 %v1538
    %v1681 = vunpack.c.l.b16 %v1539
    %v1682 = vunpack.c.h.b16 %v1539
    %v1683 = vunpack.c.l.b16 %v1540
    %v1684 = vunpack.c.h.b16 %v1540
    %v1685 = vpack.c.b16 %v1655, %v1653
    %v1686 = vpack.c.b16 %v1656, %v1654
    %v1687 = vpack.c.b16 %v1659, %v1657
    %v1688 = vpack.c.b16 %v1660, %v1658
    %v1689 = vpack.c.b16 %v1663, %v1661
    %v1690 = vpack.c.b16 %v1664, %v1662
    %v1691 = vpack.c.b16 %v1667, %v1665
    %v1692 = vpack.c.b16 %v1668, %v1666
    %v1693 = vpack.c.b16 %v1671, %v1669
    %v1694 = vpack.c.b16 %v1672, %v1670
    %v1695 = vpack.c.b16 %v1675, %v1673
    %v1696 = vpack.c.b16 %v1676, %v1674
    %v1697 = vpack.c.b16 %v1679, %v1677
    %v1698 = vpack.c.b16 %v1680, %v1678
    %v1699 = vpack.c.b16 %v1683, %v1681
    %v1700 = vpack.c.b16 %v1684, %v1682
    %1717 = vmatpush.bf16.msra.mxu0 %v1489
    %1718 = vmatpush.bf16.msra.mxu0 %v1485
    %1719 = vmatpush.bf16.msra.mxu0 %v1481
    %1720 = vmatpush.bf16.msra.mxu0 %v1477
    %1721 = vmatpush.bf16.msra.mxu0 %v1473
    %1722 = vmatpush.bf16.msra.mxu0 %v1469
    %1723 = vmatpush.bf16.msra.mxu0 %v1465
    %1724 = vmatpush.bf16.msra.mxu0 %v1461
    %1725 = vmatmul.bf16.gmra.mxu0 %v1685
    %v1726 = vpop.f32.mrf.mxu0
    %v1727 = vadd.f32 %v1560, %v1726
    %v1728 = vpop.f32.mrf.mxu0
    %v1729 = vadd.f32 %v1565, %v1728
    %1730 = vmatmul.bf16.gmra.mxu0 %v1687
    %v1731 = vpop.f32.mrf.mxu0
    %v1732 = vadd.f32 %v1570, %v1731
    %v1733 = vpop.f32.mrf.mxu0
    %v1734 = vadd.f32 %v1575, %v1733
    %1735 = vmatmul.bf16.gmra.mxu0 %v1689
    %v1736 = vpop.f32.mrf.mxu0
    %v1737 = vadd.f32 %v1580, %v1736
    %v1738 = vpop.f32.mrf.mxu0
    %v1739 = vadd.f32 %v1585, %v1738
    %1740 = vmatmul.bf16.gmra.mxu0 %v1691
    %v1741 = vpop.f32.mrf.mxu0
    %v1742 = vadd.f32 %v1590, %v1741
    %v1743 = vpop.f32.mrf.mxu0
    %v1744 = vadd.f32 %v1595, %v1743
    %1745 = vmatmul.bf16.gmra.mxu0 %v1693
    %v1746 = vpop.f32.mrf.mxu0
    %v1747 = vadd.f32 %v1600, %v1746
    %v1748 = vpop.f32.mrf.mxu0
    %v1749 = vadd.f32 %v1605, %v1748
    %1750 = vmatmul.bf16.gmra.mxu0 %v1695
    %v1751 = vpop.f32.mrf.mxu0
    %v1752 = vadd.f32 %v1610, %v1751
    %v1753 = vpop.f32.mrf.mxu0
    %v1754 = vadd.f32 %v1615, %v1753
    %1755 = vmatmul.bf16.gmra.mxu0 %v1697
    %v1756 = vpop.f32.mrf.mxu0
    %v1757 = vadd.f32 %v1620, %v1756
    %v1758 = vpop.f32.mrf.mxu0
    %v1759 = vadd.f32 %v1625, %v1758
    %1760 = vmatmul.bf16.gmra.mxu0 %v1699
    %v1761 = vpop.f32.mrf.mxu0
    %v1762 = vadd.f32 %v1630, %v1761
    %v1763 = vpop.f32.mrf.mxu0
    %v1764 = vadd.f32 %v1635, %v1763
    %1765 = vdwg.mxu0
    %1766 = vmatpush.bf16.msra.mxu0 %v1521
    %1767 = vmatpush.bf16.msra.mxu0 %v1517
    %1768 = vmatpush.bf16.msra.mxu0 %v1513
    %1769 = vmatpush.bf16.msra.mxu0 %v1509
    %1770 = vmatpush.bf16.msra.mxu0 %v1505
    %1771 = vmatpush.bf16.msra.mxu0 %v1501
    %1772 = vmatpush.bf16.msra.mxu0 %v1497
    %1773 = vmatpush.bf16.msra.mxu0 %v1493
    %1774 = vmatmul.bf16.gmra.mxu0 %v1686
    %v1775 = vpop.f32.mrf.mxu0
    %v1776 = vadd.f32 %v1727, %v1775
    %v1777 = vpop.f32.mrf.mxu0
    %v1778 = vadd.f32 %v1729, %v1777
    %1779 = vmatmul.bf16.gmra.mxu0 %v1688
    %v1780 = vpop.f32.mrf.mxu0
    %v1781 = vadd.f32 %v1732, %v1780
    %v1782 = vpop.f32.mrf.mxu0
    %v1783 = vadd.f32 %v1734, %v1782
    %1784 = vmatmul.bf16.gmra.mxu0 %v1690
    %v1785 = vpop.f32.mrf.mxu0
    %v1786 = vadd.f32 %v1737, %v1785
    %v1787 = vpop.f32.mrf.mxu0
    %v1788 = vadd.f32 %v1739, %v1787
    %1789 = vmatmul.bf16.gmra.mxu0 %v1692
    %v1790 = vpop.f32.mrf.mxu0
    %v1791 = vadd.f32 %v1742, %v1790
    %v1792 = vpop.f32.mrf.mxu0
    %v1793 = vadd.f32 %v1744, %v1792
    %1794 = vmatmul.bf16.gmra.mxu0 %v1694
    %v1795 = vpop.f32.mrf.mxu0
    %v1796 = vadd.f32 %v1747, %v1795
    %v1797 = vpop.f32.mrf.mxu0
    %v1798 = vadd.f32 %v1749, %v1797
    %1799 = vmatmul.bf16.gmra.mxu0 %v1696
    %v1800 = vpop.f32.mrf.mxu0
    %v1801 = vadd.f32 %v1752, %v1800
    %v1802 = vpop.f32.mrf.mxu0
    %v1803 = vadd.f32 %v1754, %v1802
    %1804 = vmatmul.bf16.gmra.mxu0 %v1698
    %v1805 = vpop.f32.mrf.mxu0
    %v1806 = vadd.f32 %v1757, %v1805
    %v1807 = vpop.f32.mrf.mxu0
    %v1808 = vadd.f32 %v1759, %v1807
    %1809 = vmatmul.bf16.gmra.mxu0 %v1700
    %v1810 = vpop.f32.mrf.mxu0
    %v1811 = vadd.f32 %v1762, %v1810
    %v1812 = vpop.f32.mrf.mxu0
    %v1813 = vadd.f32 %v1764, %v1812
    %1814 = vdwg.mxu0
    %1815 = vmatpush.bf16.msra.mxu0 %v1490
    %1816 = vmatpush.bf16.msra.mxu0 %v1486
    %1817 = vmatpush.bf16.msra.mxu0 %v1482
    %1818 = vmatpush.bf16.msra.mxu0 %v1478
    %1819 = vmatpush.bf16.msra.mxu0 %v1474
    %1820 = vmatpush.bf16.msra.mxu0 %v1470
    %1821 = vmatpush.bf16.msra.mxu0 %v1466
    %1822 = vmatpush.bf16.msra.mxu0 %v1462
    %1823 = vmatmul.bf16.gmra.mxu0 %v1685
    %v1824 = vpop.f32.mrf.mxu0
    %v1825 = vadd.f32 %v1560, %v1824
    %v1826 = vpop.f32.mrf.mxu0
    %v1827 = vadd.f32 %v1565, %v1826
    %1828 = vmatmul.bf16.gmra.mxu0 %v1687
    %v1829 = vpop.f32.mrf.mxu0
    %v1830 = vadd.f32 %v1570, %v1829
    %v1831 = vpop.f32.mrf.mxu0
    %v1832 = vadd.f32 %v1575, %v1831
    %1833 = vmatmul.bf16.gmra.mxu0 %v1689
    %v1834 = vpop.f32.mrf.mxu0
    %v1835 = vadd.f32 %v1580, %v1834
    %v1836 = vpop.f32.mrf.mxu0
    %v1837 = vadd.f32 %v1585, %v1836
    %1838 = vmatmul.bf16.gmra.mxu0 %v1691
    %v1839 = vpop.f32.mrf.mxu0
    %v1840 = vadd.f32 %v1590, %v1839
    %v1841 = vpop.f32.mrf.mxu0
    %v1842 = vadd.f32 %v1595, %v1841
    %1843 = vmatmul.bf16.gmra.mxu0 %v1693
    %v1844 = vpop.f32.mrf.mxu0
    %v1845 = vadd.f32 %v1600, %v1844
    %v1846 = vpop.f32.mrf.mxu0
    %v1847 = vadd.f32 %v1605, %v1846
    %1848 = vmatmul.bf16.gmra.mxu0 %v1695
    %v1849 = vpop.f32.mrf.mxu0
    %v1850 = vadd.f32 %v1610, %v1849
    %v1851 = vpop.f32.mrf.mxu0
    %v1852 = vadd.f32 %v1615, %v1851
    %1853 = vmatmul.bf16.gmra.mxu0 %v1697
    %v1854 = vpop.f32.mrf.mxu0
    %v1855 = vadd.f32 %v1620, %v1854
    %v1856 = vpop.f32.mrf.mxu0
    %v1857 = vadd.f32 %v1625, %v1856
    %1858 = vmatmul.bf16.gmra.mxu0 %v1699
    %v1859 = vpop.f32.mrf.mxu0
    %v1860 = vadd.f32 %v1630, %v1859
    %v1861 = vpop.f32.mrf.mxu0
    %v1862 = vadd.f32 %v1635, %v1861
    %1863 = vdwg.mxu0
    %1864 = vmatpush.bf16.msra.mxu0 %v1522
    %1865 = vmatpush.bf16.msra.mxu0 %v1518
    %1866 = vmatpush.bf16.msra.mxu0 %v1514
    %1867 = vmatpush.bf16.msra.mxu0 %v1510
    %1868 = vmatpush.bf16.msra.mxu0 %v1506
    %1869 = vmatpush.bf16.msra.mxu0 %v1502
    %1870 = vmatpush.bf16.msra.mxu0 %v1498
    %1871 = vmatpush.bf16.msra.mxu0 %v1494
    %1872 = vmatmul.bf16.gmra.mxu0 %v1686
    %v1873 = vpop.f32.mrf.mxu0
    %v1874 = vadd.f32 %v1825, %v1873
    %v1875 = vpop.f32.mrf.mxu0
    %v1876 = vadd.f32 %v1827, %v1875
    %1877 = vmatmul.bf16.gmra.mxu0 %v1688
    %v1878 = vpop.f32.mrf.mxu0
    %v1879 = vadd.f32 %v1830, %v1878
    %v1880 = vpop.f32.mrf.mxu0
    %v1881 = vadd.f32 %v1832, %v1880
    %1882 = vmatmul.bf16.gmra.mxu0 %v1690
    %v1883 = vpop.f32.mrf.mxu0
    %v1884 = vadd.f32 %v1835, %v1883
    %v1885 = vpop.f32.mrf.mxu0
    %v1886 = vadd.f32 %v1837, %v1885
    %1887 = vmatmul.bf16.gmra.mxu0 %v1692
    %v1888 = vpop.f32.mrf.mxu0
    %v1889 = vadd.f32 %v1840, %v1888
    %v1890 = vpop.f32.mrf.mxu0
    %v1891 = vadd.f32 %v1842, %v1890
    %1892 = vmatmul.bf16.gmra.mxu0 %v1694
    %v1893 = vpop.f32.mrf.mxu0
    %v1894 = vadd.f32 %v1845, %v1893
    %v1895 = vpop.f32.mrf.mxu0
    %v1896 = vadd.f32 %v1847, %v1895
    %1897 = vmatmul.bf16.gmra.mxu0 %v1696
    %v1898 = vpop.f32.mrf.mxu0
    %v1899 = vadd.f32 %v1850, %v1898
    %v1900 = vpop.f32.mrf.mxu0
    %v1901 = vadd.f32 %v1852, %v1900
    %1902 = vmatmul.bf16.gmra.mxu0 %v1698
    %v1903 = vpop.f32.mrf.mxu0
    %v1904 = vadd.f32 %v1855, %v1903
    %v1905 = vpop.f32.mrf.mxu0
    %v1906 = vadd.f32 %v1857, %v1905
    %1907 = vmatmul.bf16.gmra.mxu0 %v1700
    %v1908 = vpop.f32.mrf.mxu0
    %v1909 = vadd.f32 %v1860, %v1908
    %v1910 = vpop.f32.mrf.mxu0
    %v1911 = vadd.f32 %v1862, %v1910
    %1912 = vdwg.mxu0
    %1913 = vmatpush.bf16.msra.mxu0 %v1491
    %1914 = vmatpush.bf16.msra.mxu0 %v1487
    %1915 = vmatpush.bf16.msra.mxu0 %v1483
    %1916 = vmatpush.bf16.msra.mxu0 %v1479
    %1917 = vmatpush.bf16.msra.mxu0 %v1475
    %1918 = vmatpush.bf16.msra.mxu0 %v1471
    %1919 = vmatpush.bf16.msra.mxu0 %v1467
    %1920 = vmatpush.bf16.msra.mxu0 %v1463
    %1921 = vmatmul.bf16.gmra.mxu0 %v1685
    %v1922 = vpop.f32.mrf.mxu0
    %v1923 = vadd.f32 %v1560, %v1922
    %v1924 = vpop.f32.mrf.mxu0
    %v1925 = vadd.f32 %v1565, %v1924
    %1926 = vmatmul.bf16.gmra.mxu0 %v1687
    %v1927 = vpop.f32.mrf.mxu0
    %v1928 = vadd.f32 %v1570, %v1927
    %v1929 = vpop.f32.mrf.mxu0
    %v1930 = vadd.f32 %v1575, %v1929
    %1931 = vmatmul.bf16.gmra.mxu0 %v1689
    %v1932 = vpop.f32.mrf.mxu0
    %v1933 = vadd.f32 %v1580, %v1932
    %v1934 = vpop.f32.mrf.mxu0
    %v1935 = vadd.f32 %v1585, %v1934
    %1936 = vmatmul.bf16.gmra.mxu0 %v1691
    %v1937 = vpop.f32.mrf.mxu0
    %v1938 = vadd.f32 %v1590, %v1937
    %v1939 = vpop.f32.mrf.mxu0
    %v1940 = vadd.f32 %v1595, %v1939
    %1941 = vmatmul.bf16.gmra.mxu0 %v1693
    %v1942 = vpop.f32.mrf.mxu0
    %v1943 = vadd.f32 %v1600, %v1942
    %v1944 = vpop.f32.mrf.mxu0
    %v1945 = vadd.f32 %v1605, %v1944
    %1946 = vmatmul.bf16.gmra.mxu0 %v1695
    %v1947 = vpop.f32.mrf.mxu0
    %v1948 = vadd.f32 %v1610, %v1947
    %v1949 = vpop.f32.mrf.mxu0
    %v1950 = vadd.f32 %v1615, %v1949
    %1951 = vmatmul.bf16.gmra.mxu0 %v1697
    %v1952 = vpop.f32.mrf.mxu0
    %v1953 = vadd.f32 %v1620, %v1952
    %v1954 = vpop.f32.mrf.mxu0
    %v1955 = vadd.f32 %v1625, %v1954
    %1956 = vmatmul.bf16.gmra.mxu0 %v1699
    %v1957 = vpop.f32.mrf.mxu0
    %v1958 = vadd.f32 %v1630, %v1957
    %v1959 = vpop.f32.mrf.mxu0
    %v1960 = vadd.f32 %v1635, %v1959
    %1961 = vdwg.mxu0
    %1962 = vmatpush.bf16.msra.mxu0 %v1523
    %1963 = vmatpush.bf16.msra.mxu0 %v1519
    %1964 = vmatpush.bf16.msra.mxu0 %v1515
    %1965 = vmatpush.bf16.msra.mxu0 %v1511
    %1966 = vmatpush.bf16.msra.mxu0 %v1507
    %1967 = vmatpush.bf16.msra.mxu0 %v1503
    %1968 = vmatpush.bf16.msra.mxu0 %v1499
    %1969 = vmatpush.bf16.msra.mxu0 %v1495
    %1970 = vmatmul.bf16.gmra.mxu0 %v1686
    %v1971 = vpop.f32.mrf.mxu0
    %v1972 = vadd.f32 %v1923, %v1971
    %v1973 = vpop.f32.mrf.mxu0
    %v1974 = vadd.f32 %v1925, %v1973
    %1975 = vmatmul.bf16.gmra.mxu0 %v1688
    %v1976 = vpop.f32.mrf.mxu0
    %v1977 = vadd.f32 %v1928, %v1976
    %v1978 = vpop.f32.mrf.mxu0
    %v1979 = vadd.f32 %v1930, %v1978
    %1980 = vmatmul.bf16.gmra.mxu0 %v1690
    %v1981 = vpop.f32.mrf.mxu0
    %v1982 = vadd.f32 %v1933, %v1981
    %v1983 = vpop.f32.mrf.mxu0
    %v1984 = vadd.f32 %v1935, %v1983
    %1985 = vmatmul.bf16.gmra.mxu0 %v1692
    %v1986 = vpop.f32.mrf.mxu0
    %v1987 = vadd.f32 %v1938, %v1986
    %v1988 = vpop.f32.mrf.mxu0
    %v1989 = vadd.f32 %v1940, %v1988
    %1990 = vmatmul.bf16.gmra.mxu0 %v1694
    %v1991 = vpop.f32.mrf.mxu0
    %v1992 = vadd.f32 %v1943, %v1991
    %v1993 = vpop.f32.mrf.mxu0
    %v1994 = vadd.f32 %v1945, %v1993
    %1995 = vmatmul.bf16.gmra.mxu0 %v1696
    %v1996 = vpop.f32.mrf.mxu0
    %v1997 = vadd.f32 %v1948, %v1996
    %v1998 = vpop.f32.mrf.mxu0
    %v1999 = vadd.f32 %v1950, %v1998
    %2000 = vmatmul.bf16.gmra.mxu0 %v1698
    %v2001 = vpop.f32.mrf.mxu0
    %v2002 = vadd.f32 %v1953, %v2001
    %v2003 = vpop.f32.mrf.mxu0
    %v2004 = vadd.f32 %v1955, %v2003
    %2005 = vmatmul.bf16.gmra.mxu0 %v1700
    %v2006 = vpop.f32.mrf.mxu0
    %v2007 = vadd.f32 %v1958, %v2006
    %v2008 = vpop.f32.mrf.mxu0
    %v2009 = vadd.f32 %v1960, %v2008
    %2010 = vdwg.mxu0
    %2011 = vmatpush.bf16.msra.mxu0 %v1492
    %2012 = vmatpush.bf16.msra.mxu0 %v1488
    %2013 = vmatpush.bf16.msra.mxu0 %v1484
    %2014 = vmatpush.bf16.msra.mxu0 %v1480
    %2015 = vmatpush.bf16.msra.mxu0 %v1476
    %2016 = vmatpush.bf16.msra.mxu0 %v1472
    %2017 = vmatpush.bf16.msra.mxu0 %v1468
    %2018 = vmatpush.bf16.msra.mxu0 %v1464
    %2019 = vmatmul.bf16.gmra.mxu0 %v1685
    %v2020 = vpop.f32.mrf.mxu0
    %v2021 = vadd.f32 %v1560, %v2020
    %v2022 = vpop.f32.mrf.mxu0
    %v2023 = vadd.f32 %v1565, %v2022
    %2024 = vmatmul.bf16.gmra.mxu0 %v1687
    %v2025 = vpop.f32.mrf.mxu0
    %v2026 = vadd.f32 %v1570, %v2025
    %v2027 = vpop.f32.mrf.mxu0
    %v2028 = vadd.f32 %v1575, %v2027
    %2029 = vmatmul.bf16.gmra.mxu0 %v1689
    %v2030 = vpop.f32.mrf.mxu0
    %v2031 = vadd.f32 %v1580, %v2030
    %v2032 = vpop.f32.mrf.mxu0
    %v2033 = vadd.f32 %v1585, %v2032
    %2034 = vmatmul.bf16.gmra.mxu0 %v1691
    %v2035 = vpop.f32.mrf.mxu0
    %v2036 = vadd.f32 %v1590, %v2035
    %v2037 = vpop.f32.mrf.mxu0
    %v2038 = vadd.f32 %v1595, %v2037
    %2039 = vmatmul.bf16.gmra.mxu0 %v1693
    %v2040 = vpop.f32.mrf.mxu0
    %v2041 = vadd.f32 %v1600, %v2040
    %v2042 = vpop.f32.mrf.mxu0
    %v2043 = vadd.f32 %v1605, %v2042
    %2044 = vmatmul.bf16.gmra.mxu0 %v1695
    %v2045 = vpop.f32.mrf.mxu0
    %v2046 = vadd.f32 %v1610, %v2045
    %v2047 = vpop.f32.mrf.mxu0
    %v2048 = vadd.f32 %v1615, %v2047
    %2049 = vmatmul.bf16.gmra.mxu0 %v1697
    %v2050 = vpop.f32.mrf.mxu0
    %v2051 = vadd.f32 %v1620, %v2050
    %v2052 = vpop.f32.mrf.mxu0
    %v2053 = vadd.f32 %v1625, %v2052
    %2054 = vmatmul.bf16.gmra.mxu0 %v1699
    %v2055 = vpop.f32.mrf.mxu0
    %v2056 = vadd.f32 %v1630, %v2055
    %v2057 = vpop.f32.mrf.mxu0
    %v2058 = vadd.f32 %v1635, %v2057
    %2059 = vdwg.mxu0
    %2060 = vmatpush.bf16.msra.mxu0 %v1524
    %2061 = vmatpush.bf16.msra.mxu0 %v1520
    %2062 = vmatpush.bf16.msra.mxu0 %v1516
    %2063 = vmatpush.bf16.msra.mxu0 %v1512
    %2064 = vmatpush.bf16.msra.mxu0 %v1508
    %2065 = vmatpush.bf16.msra.mxu0 %v1504
    %2066 = vmatpush.bf16.msra.mxu0 %v1500
    %2067 = vmatpush.bf16.msra.mxu0 %v1496
    %2068 = vmatmul.bf16.gmra.mxu0 %v1686
    %v2069 = vpop.f32.mrf.mxu0
    %v2070 = vadd.f32 %v2021, %v2069
    %v2071 = vpop.f32.mrf.mxu0
    %v2072 = vadd.f32 %v2023, %v2071
    %2073 = vmatmul.bf16.gmra.mxu0 %v1688
    %v2074 = vpop.f32.mrf.mxu0
    %v2075 = vadd.f32 %v2026, %v2074
    %v2076 = vpop.f32.mrf.mxu0
    %v2077 = vadd.f32 %v2028, %v2076
    %2078 = vmatmul.bf16.gmra.mxu0 %v1690
    %v2079 = vpop.f32.mrf.mxu0
    %v2080 = vadd.f32 %v2031, %v2079
    %v2081 = vpop.f32.mrf.mxu0
    %v2082 = vadd.f32 %v2033, %v2081
    %2083 = vmatmul.bf16.gmra.mxu0 %v1692
    %v2084 = vpop.f32.mrf.mxu0
    %v2085 = vadd.f32 %v2036, %v2084
    %v2086 = vpop.f32.mrf.mxu0
    %v2087 = vadd.f32 %v2038, %v2086
    %2088 = vmatmul.bf16.gmra.mxu0 %v1694
    %v2089 = vpop.f32.mrf.mxu0
    %v2090 = vadd.f32 %v2041, %v2089
    %v2091 = vpop.f32.mrf.mxu0
    %v2092 = vadd.f32 %v2043, %v2091
    %2093 = vmatmul.bf16.gmra.mxu0 %v1696
    %v2094 = vpop.f32.mrf.mxu0
    %v2095 = vadd.f32 %v2046, %v2094
    %v2096 = vpop.f32.mrf.mxu0
    %v2097 = vadd.f32 %v2048, %v2096
    %2098 = vmatmul.bf16.gmra.mxu0 %v1698
    %v2099 = vpop.f32.mrf.mxu0
    %v2100 = vadd.f32 %v2051, %v2099
    %v2101 = vpop.f32.mrf.mxu0
    %v2102 = vadd.f32 %v2053, %v2101
    %2103 = vmatmul.bf16.gmra.mxu0 %v1700
    %v2104 = vpop.f32.mrf.mxu0
    %v2105 = vadd.f32 %v2056, %v2104
    %v2106 = vpop.f32.mrf.mxu0
    %v2107 = vadd.f32 %v2058, %v2106
    %2108 = vdwg.mxu0
    %v2109 = vmax.f32 %v1776, 0.0
    %v2110 = vmax.f32 %v1874, 0.0
    %v2111 = vmax.f32 %v1972, 0.0
    %v2112 = vmax.f32 %v2070, 0.0
    %v2113 = vmax.f32 %v1778, 0.0
    %v2114 = vmax.f32 %v1876, 0.0
    %v2115 = vmax.f32 %v1974, 0.0
    %v2116 = vmax.f32 %v2072, 0.0
    %v2117 = vmax.f32 %v1781, 0.0
    %v2118 = vmax.f32 %v1879, 0.0
    %v2119 = vmax.f32 %v1977, 0.0
    %v2120 = vmax.f32 %v2075, 0.0
    %v2121 = vmax.f32 %v1783, 0.0
    %v2122 = vmax.f32 %v1881, 0.0
    %v2123 = vmax.f32 %v1979, 0.0
    %v2124 = vmax.f32 %v2077, 0.0
    %v2125 = vmax.f32 %v1786, 0.0
    %v2126 = vmax.f32 %v1884, 0.0
    %v2127 = vmax.f32 %v1982, 0.0
    %v2128 = vmax.f32 %v2080, 0.0
    %v2129 = vmax.f32 %v1788, 0.0
    %v2130 = vmax.f32 %v1886, 0.0
    %v2131 = vmax.f32 %v1984, 0.0
    %v2132 = vmax.f32 %v2082, 0.0
    %v2133 = vmax.f32 %v1791, 0.0
    %v2134 = vmax.f32 %v1889, 0.0
    %v2135 = vmax.f32 %v1987, 0.0
    %v2136 = vmax.f32 %v2085, 0.0
    %v2137 = vmax.f32 %v1793, 0.0
    %v2138 = vmax.f32 %v1891, 0.0
    %v2139 = vmax.f32 %v1989, 0.0
    %v2140 = vmax.f32 %v2087, 0.0
    %v2141 = vmax.f32 %v1796, 0.0
    %v2142 = vmax.f32 %v1894, 0.0
    %v2143 = vmax.f32 %v1992, 0.0
    %v2144 = vmax.f32 %v2090, 0.0
    %v2145 = vmax.f32 %v1798, 0.0
    %v2146 = vmax.f32 %v1896, 0.0
    %v2147 = vmax.f32 %v1994, 0.0
    %v2148 = vmax.f32 %v2092, 0.0
    %v2149 = vmax.f32 %v1801, 0.0
    %v2150 = vmax.f32 %v1899, 0.0
    %v2151 = vmax.f32 %v1997, 0.0
    %v2152 = vmax.f32 %v2095, 0.0
    %v2153 = vmax.f32 %v1803, 0.0
    %v2154 = vmax.f32 %v1901, 0.0
    %v2155 = vmax.f32 %v1999, 0.0
    %v2156 = vmax.f32 %v2097, 0.0
    %v2157 = vmax.f32 %v1806, 0.0
    %v2158 = vmax.f32 %v1904, 0.0
    %v2159 = vmax.f32 %v2002, 0.0
    %v2160 = vmax.f32 %v2100, 0.0
    %v2161 = vmax.f32 %v1808, 0.0
    %v2162 = vmax.f32 %v1906, 0.0
    %v2163 = vmax.f32 %v2004, 0.0
    %v2164 = vmax.f32 %v2102, 0.0
    %v2165 = vmax.f32 %v1811, 0.0
    %v2166 = vmax.f32 %v1909, 0.0
    %v2167 = vmax.f32 %v2007, 0.0
    %v2168 = vmax.f32 %v2105, 0.0
    %v2169 = vmax.f32 %v1813, 0.0
    %v2170 = vmax.f32 %v1911, 0.0
    %v2171 = vmax.f32 %v2009, 0.0
    %v2172 = vmax.f32 %v2107, 0.0
    %v2173 = vld [vmem:[%s6] sm:$0xff]
    %v2174 = vld [vmem:[%s6 + $0x8] sm:$0xff]
    %v2175 = vld [vmem:[%s6 + $0x10] sm:$0xff]
    %v2176 = vld [vmem:[%s6 + $0x18] sm:$0xff]
    %v2177 = vld [vmem:[%s6 + $0x20] sm:$0xff]
    %v2178 = vld [vmem:[%s6 + $0x28] sm:$0xff]
    %v2179 = vld [vmem:[%s6 + $0x30] sm:$0xff]
    %v2180 = vld [vmem:[%s6 + $0x38] sm:$0xff]
    %v2181 = vld [vmem:[%s6 + $0x40] sm:$0xff]
    %v2182 = vld [vmem:[%s6 + $0x48] sm:$0xff]
    %v2183 = vld [vmem:[%s6 + $0x50] sm:$0xff]
    %v2184 = vld [vmem:[%s6 + $0x58] sm:$0xff]
    %v2185 = vld [vmem:[%s6 + $0x60] sm:$0xff]
    %v2186 = vld [vmem:[%s6 + $0x68] sm:$0xff]
    %v2187 = vld [vmem:[%s6 + $0x70] sm:$0xff]
    %v2188 = vld [vmem:[%s6 + $0x78] sm:$0xff]
    %2190 = vset.pattern.permute.xlu0 0
    %2191 = vperm.xlu0 %2190, %v2173
    %v2192 = vpop.permute.xlu0 %2191
    %2195 = vset.pattern.permute.xlu0 0
    %2196 = vperm.xlu0 %2195, %v2174
    %v2197 = vpop.permute.xlu0 %2196
    %2200 = vset.pattern.permute.xlu0 0
    %2201 = vperm.xlu0 %2200, %v2175
    %v2202 = vpop.permute.xlu0 %2201
    %2205 = vset.pattern.permute.xlu0 0
    %2206 = vperm.xlu0 %2205, %v2176
    %v2207 = vpop.permute.xlu0 %2206
    %2210 = vset.pattern.permute.xlu0 0
    %2211 = vperm.xlu0 %2210, %v2177
    %v2212 = vpop.permute.xlu0 %2211
    %2215 = vset.pattern.permute.xlu0 0
    %2216 = vperm.xlu0 %2215, %v2178
    %v2217 = vpop.permute.xlu0 %2216
    %2220 = vset.pattern.permute.xlu0 0
    %2221 = vperm.xlu0 %2220, %v2179
    %v2222 = vpop.permute.xlu0 %2221
    %2225 = vset.pattern.permute.xlu0 0
    %2226 = vperm.xlu0 %2225, %v2180
    %v2227 = vpop.permute.xlu0 %2226
    %2230 = vset.pattern.permute.xlu0 0
    %2231 = vperm.xlu0 %2230, %v2181
    %v2232 = vpop.permute.xlu0 %2231
    %2235 = vset.pattern.permute.xlu0 0
    %2236 = vperm.xlu0 %2235, %v2182
    %v2237 = vpop.permute.xlu0 %2236
    %2240 = vset.pattern.permute.xlu0 0
    %2241 = vperm.xlu0 %2240, %v2183
    %v2242 = vpop.permute.xlu0 %2241
    %2245 = vset.pattern.permute.xlu0 0
    %2246 = vperm.xlu0 %2245, %v2184
    %v2247 = vpop.permute.xlu0 %2246
    %2250 = vset.pattern.permute.xlu0 0
    %2251 = vperm.xlu0 %2250, %v2185
    %v2252 = vpop.permute.xlu0 %2251
    %2255 = vset.pattern.permute.xlu0 0
    %2256 = vperm.xlu0 %2255, %v2186
    %v2257 = vpop.permute.xlu0 %2256
    %2260 = vset.pattern.permute.xlu0 0
    %2261 = vperm.xlu0 %2260, %v2187
    %v2262 = vpop.permute.xlu0 %2261
    %2265 = vset.pattern.permute.xlu0 0
    %2266 = vperm.xlu0 %2265, %v2188
    %v2267 = vpop.permute.xlu0 %2266
    %v2269 = vmul.f32 %v2109, %v2192
    %v2270 = vmul.f32 %v2110, %v2192
    %v2271 = vmul.f32 %v2111, %v2192
    %v2272 = vmul.f32 %v2112, %v2192
    %v2273 = vmul.f32 %v2113, %v2197
    %v2274 = vmul.f32 %v2114, %v2197
    %v2275 = vmul.f32 %v2115, %v2197
    %v2276 = vmul.f32 %v2116, %v2197
    %v2277 = vmul.f32 %v2117, %v2202
    %v2278 = vmul.f32 %v2118, %v2202
    %v2279 = vmul.f32 %v2119, %v2202
    %v2280 = vmul.f32 %v2120, %v2202
    %v2281 = vmul.f32 %v2121, %v2207
    %v2282 = vmul.f32 %v2122, %v2207
    %v2283 = vmul.f32 %v2123, %v2207
    %v2284 = vmul.f32 %v2124, %v2207
    %v2285 = vmul.f32 %v2125, %v2212
    %v2286 = vmul.f32 %v2126, %v2212
    %v2287 = vmul.f32 %v2127, %v2212
    %v2288 = vmul.f32 %v2128, %v2212
    %v2289 = vmul.f32 %v2129, %v2217
    %v2290 = vmul.f32 %v2130, %v2217
    %v2291 = vmul.f32 %v2131, %v2217
    %v2292 = vmul.f32 %v2132, %v2217
    %v2293 = vmul.f32 %v2133, %v2222
    %v2294 = vmul.f32 %v2134, %v2222
    %v2295 = vmul.f32 %v2135, %v2222
    %v2296 = vmul.f32 %v2136, %v2222
    %v2297 = vmul.f32 %v2137, %v2227
    %v2298 = vmul.f32 %v2138, %v2227
    %v2299 = vmul.f32 %v2139, %v2227
    %v2300 = vmul.f32 %v2140, %v2227
    %v2301 = vmul.f32 %v2141, %v2232
    %v2302 = vmul.f32 %v2142, %v2232
    %v2303 = vmul.f32 %v2143, %v2232
    %v2304 = vmul.f32 %v2144, %v2232
    %v2305 = vmul.f32 %v2145, %v2237
    %v2306 = vmul.f32 %v2146, %v2237
    %v2307 = vmul.f32 %v2147, %v2237
    %v2308 = vmul.f32 %v2148, %v2237
    %v2309 = vmul.f32 %v2149, %v2242
    %v2310 = vmul.f32 %v2150, %v2242
    %v2311 = vmul.f32 %v2151, %v2242
    %v2312 = vmul.f32 %v2152, %v2242
    %v2313 = vmul.f32 %v2153, %v2247
    %v2314 = vmul.f32 %v2154, %v2247
    %v2315 = vmul.f32 %v2155, %v2247
    %v2316 = vmul.f32 %v2156, %v2247
    %v2317 = vmul.f32 %v2157, %v2252
    %v2318 = vmul.f32 %v2158, %v2252
    %v2319 = vmul.f32 %v2159, %v2252
    %v2320 = vmul.f32 %v2160, %v2252
    %v2321 = vmul.f32 %v2161, %v2257
    %v2322 = vmul.f32 %v2162, %v2257
    %v2323 = vmul.f32 %v2163, %v2257
    %v2324 = vmul.f32 %v2164, %v2257
    %v2325 = vmul.f32 %v2165, %v2262
    %v2326 = vmul.f32 %v2166, %v2262
    %v2327 = vmul.f32 %v2167, %v2262
    %v2328 = vmul.f32 %v2168, %v2262
    %v2329 = vmul.f32 %v2169, %v2267
    %v2330 = vmul.f32 %v2170, %v2267
    %v2331 = vmul.f32 %v2171, %v2267
    %v2332 = vmul.f32 %v2172, %v2267
    %v2333 = vadd.f32 %v2269, %v2273
    %v2334 = vadd.f32 %v2333, %v2277
    %v2335 = vadd.f32 %v2334, %v2281
    %v2336 = vadd.f32 %v2335, %v2285
    %v2337 = vadd.f32 %v2336, %v2289
    %v2338 = vadd.f32 %v2337, %v2293
    %v2339 = vadd.f32 %v2338, %v2297
    %v2340 = vadd.f32 %v2339, %v2301
    %v2341 = vadd.f32 %v2340, %v2305
    %v2342 = vadd.f32 %v2341, %v2309
    %v2343 = vadd.f32 %v2342, %v2313
    %v2344 = vadd.f32 %v2343, %v2317
    %v2345 = vadd.f32 %v2344, %v2321
    %v2346 = vadd.f32 %v2345, %v2325
    %v2347 = vadd.f32 %v2346, %v2329
    %v2348 = vrot.slane %v2347, 4
    %v2349 = vadd.f32 %v2347, %v2348
    %v2350 = vrot.slane %v2349, 2
    %v2351 = vadd.f32 %v2349, %v2350
    %v2352 = vrot.slane %v2351, 1
    %v2353 = vadd.f32 %v2351, %v2352
    %v2354 = vadd.f32 %v2270, %v2274
    %v2355 = vadd.f32 %v2354, %v2278
    %v2356 = vadd.f32 %v2355, %v2282
    %v2357 = vadd.f32 %v2356, %v2286
    %v2358 = vadd.f32 %v2357, %v2290
    %v2359 = vadd.f32 %v2358, %v2294
    %v2360 = vadd.f32 %v2359, %v2298
    %v2361 = vadd.f32 %v2360, %v2302
    %v2362 = vadd.f32 %v2361, %v2306
    %v2363 = vadd.f32 %v2362, %v2310
    %v2364 = vadd.f32 %v2363, %v2314
    %v2365 = vadd.f32 %v2364, %v2318
    %v2366 = vadd.f32 %v2365, %v2322
    %v2367 = vadd.f32 %v2366, %v2326
    %v2368 = vadd.f32 %v2367, %v2330
    %v2369 = vrot.slane %v2368, 4
    %v2370 = vadd.f32 %v2368, %v2369
    %v2371 = vrot.slane %v2370, 2
    %v2372 = vadd.f32 %v2370, %v2371
    %v2373 = vrot.slane %v2372, 1
    %v2374 = vadd.f32 %v2372, %v2373
    %v2375 = vadd.f32 %v2271, %v2275
    %v2376 = vadd.f32 %v2375, %v2279
    %v2377 = vadd.f32 %v2376, %v2283
    %v2378 = vadd.f32 %v2377, %v2287
    %v2379 = vadd.f32 %v2378, %v2291
    %v2380 = vadd.f32 %v2379, %v2295
    %v2381 = vadd.f32 %v2380, %v2299
    %v2382 = vadd.f32 %v2381, %v2303
    %v2383 = vadd.f32 %v2382, %v2307
    %v2384 = vadd.f32 %v2383, %v2311
    %v2385 = vadd.f32 %v2384, %v2315
    %v2386 = vadd.f32 %v2385, %v2319
    %v2387 = vadd.f32 %v2386, %v2323
    %v2388 = vadd.f32 %v2387, %v2327
    %v2389 = vadd.f32 %v2388, %v2331
    %v2390 = vrot.slane %v2389, 4
    %v2391 = vadd.f32 %v2389, %v2390
    %v2392 = vrot.slane %v2391, 2
    %v2393 = vadd.f32 %v2391, %v2392
    %v2394 = vrot.slane %v2393, 1
    %v2395 = vadd.f32 %v2393, %v2394
    %v2396 = vadd.f32 %v2272, %v2276
    %v2397 = vadd.f32 %v2396, %v2280
    %v2398 = vadd.f32 %v2397, %v2284
    %v2399 = vadd.f32 %v2398, %v2288
    %v2400 = vadd.f32 %v2399, %v2292
    %v2401 = vadd.f32 %v2400, %v2296
    %v2402 = vadd.f32 %v2401, %v2300
    %v2403 = vadd.f32 %v2402, %v2304
    %v2404 = vadd.f32 %v2403, %v2308
    %v2405 = vadd.f32 %v2404, %v2312
    %v2406 = vadd.f32 %v2405, %v2316
    %v2407 = vadd.f32 %v2406, %v2320
    %v2408 = vadd.f32 %v2407, %v2324
    %v2409 = vadd.f32 %v2408, %v2328
    %v2410 = vadd.f32 %v2409, %v2332
    %v2411 = vrot.slane %v2410, 4
    %v2412 = vadd.f32 %v2410, %v2411
    %v2413 = vrot.slane %v2412, 2
    %v2414 = vadd.f32 %v2412, %v2413
    %v2415 = vrot.slane %v2414, 1
    %v2416 = vadd.f32 %v2414, %v2415
    %v2417 = vadd.f32 %v324, %v584
    %v2418 = vadd.f32 %v370, %v585
    %v2419 = vadd.f32 %v416, %v586
    %v2420 = vadd.f32 %v462, %v587
    %v2421 = vadd.f32 %v2417, %v2353
    %v2422 = vadd.f32 %v2418, %v2374
    %v2423 = vadd.f32 %v2419, %v2395
    %v2424 = vadd.f32 %v2420, %v2416
    %v2425 = vxor.u32 %v2421, 2147483648
    %v2426 = vxor.u32 %v2422, 2147483648
    %v2427 = vxor.u32 %v2423, 2147483648
    %v2428 = vxor.u32 %v2424, 2147483648
    %v2429 = vmul.f32 %v2425, 1.442695
    %v2430 = vpow.pop %v2429
    %v2431 = vmul.f32 %v2426, 1.442695
    %v2432 = vpow.pop %v2431
    %v2433 = vmul.f32 %v2427, 1.442695
    %v2434 = vpow.pop %v2433
    %v2435 = vmul.f32 %v2428, 1.442695
    %v2436 = vpow.pop %v2435
    %v2437 = vadd.f32 %v2430, 1.0
    %v2438 = vadd.f32 %v2432, 1.0
    %v2439 = vadd.f32 %v2434, 1.0
    %v2440 = vadd.f32 %v2436, 1.0
    %v2441 = vrcp.pop %v2437
    %v2442 = vmul.f32 %v2437, %v2441
    %v2443 = vsub.f32 1.0, %v2442
    %v2444 = vmul.f32 %v2441, %v2443
    %v2445 = vadd.f32 %v2441, %v2444
    %vm2446 = vweird.f32 %v2437
    %vm2447 = vweird.f32 %v2441
    %vm2448 = vmor %vm2446, %vm2447
    %v2449 = vsel %vm2448, %v2441, %v2445
    %v2450 = vand.u32 2147483647, %v2437
    %vm2451 = vcmp.eq.f32.partialorder %v2450, 8.507059e+37
    %v2452 = vand.u32 %v2437, 2147483648
    %v2453 = vor.u32 1.1754944e-38, %v2452
    %v2454 = vsel %vm2451, %v2453, %v2449
    %v2455 = vmul.f32 1.0, %v2454
    %v2456 = vrcp.pop %v2438
    %v2457 = vmul.f32 %v2438, %v2456
    %v2458 = vsub.f32 1.0, %v2457
    %v2459 = vmul.f32 %v2456, %v2458
    %v2460 = vadd.f32 %v2456, %v2459
    %vm2461 = vweird.f32 %v2438
    %vm2462 = vweird.f32 %v2456
    %vm2463 = vmor %vm2461, %vm2462
    %v2464 = vsel %vm2463, %v2456, %v2460
    %v2465 = vand.u32 2147483647, %v2438
    %vm2466 = vcmp.eq.f32.partialorder %v2465, 8.507059e+37
    %v2467 = vand.u32 %v2438, 2147483648
    %v2468 = vor.u32 1.1754944e-38, %v2467
    %v2469 = vsel %vm2466, %v2468, %v2464
    %v2470 = vmul.f32 1.0, %v2469
    %v2471 = vrcp.pop %v2439
    %v2472 = vmul.f32 %v2439, %v2471
    %v2473 = vsub.f32 1.0, %v2472
    %v2474 = vmul.f32 %v2471, %v2473
    %v2475 = vadd.f32 %v2471, %v2474
    %vm2476 = vweird.f32 %v2439
    %vm2477 = vweird.f32 %v2471
    %vm2478 = vmor %vm2476, %vm2477
    %v2479 = vsel %vm2478, %v2471, %v2475
    %v2480 = vand.u32 2147483647, %v2439
    %vm2481 = vcmp.eq.f32.partialorder %v2480, 8.507059e+37
    %v2482 = vand.u32 %v2439, 2147483648
    %v2483 = vor.u32 1.1754944e-38, %v2482
    %v2484 = vsel %vm2481, %v2483, %v2479
    %v2485 = vmul.f32 1.0, %v2484
    %v2486 = vrcp.pop %v2440
    %v2487 = vmul.f32 %v2440, %v2486
    %v2488 = vsub.f32 1.0, %v2487
    %v2489 = vmul.f32 %v2486, %v2488
    %v2490 = vadd.f32 %v2486, %v2489
    %vm2491 = vweird.f32 %v2440
    %vm2492 = vweird.f32 %v2486
    %vm2493 = vmor %vm2491, %vm2492
    %v2494 = vsel %vm2493, %v2486, %v2490
    %v2495 = vand.u32 2147483647, %v2440
    %vm2496 = vcmp.eq.f32.partialorder %v2495, 8.507059e+37
    %v2497 = vand.u32 %v2440, 2147483648
    %v2498 = vor.u32 1.1754944e-38, %v2497
    %v2499 = vsel %vm2496, %v2498, %v2494
    %v2500 = vmul.f32 1.0, %v2499
    %v2505 = vrot.slane %v2470, 7
    %v2506 = vrot.slane %v2485, 6
    %v2507 = vrot.slane %v2500, 5
    %vm2508 = vcmask 1040384
    %v2509 = vsel %vm2508, %v2455, %v2505
    %vm2510 = vcmask 1042434
    %v2511 = vsel %vm2510, %v2506, %v2507
    %vm2512 = vcmask 1041408
    %v2513 = vsel %vm2512, %v2509, %v2511
    %v2515 = vlaneseq
    %vm2516 = vcmp.ge.s32.totalorder %v2515, 0
    %vm2517 = vcmp.lt.s32.totalorder %v2515, 512
    %vm2518 = vmand %vm2516, %vm2517
    %2519 = vst.msk [vmem:[#allocation2] sm:$0xf] %vm2518, %v2513
    // Predicated region
    $region30: #{deepfm_forward.1} parent=1 // pred_check
      _
    $region31: #{deepfm_forward.1} parent=1 // pred_check_branch
      %2521 = sbr.rel (0) target = $region33
    $region32: #{deepfm_forward.1} parent=1 // pred_region
      %2523 = vsyncadd [#allocation3], 0
      %s2525 = sshll.u32 [#allocation2], 4
      %s2526 = int_to_ptr.vmem [resolvable:$true] %s2525
      %s2527 = sshll.u32 %s7, 4
      %s2528 = int_to_ptr.hbm [resolvable:$true] %s2527
      %2530 = dma.vmem_to_hbm [thread:$0]  %s2526, 64, %s2528, [#allocation3]
    $region33: #{deepfm_forward.1} parent=1 // pred_fallthru
      _
    // Predicated region
    $region34: #{deepfm_forward.1} parent=1 // pred_check
      _
    $region35: #{deepfm_forward.1} parent=1 // pred_check_branch
      %2532 = sbr.rel (0) target = $region37
    $region36: #{deepfm_forward.1} parent=1 // pred_region
      %2534 = dma.done [#allocation3], 64
    $region37: #{deepfm_forward.1} parent=1 // pred_fallthru
      _
    %2535 = vsyncpa [#allocation3], 1

</llo_original>
